<compile_context>
chip_gen: v7x
topology: tpu7x:2x2x1
jax: 0.10.0
libtpu: 0.0.40
codegen_flags: <defaults>
</compile_context>

<pallas_src>
import functools

import numpy as np
import jax
import jax.numpy as jnp
from jax import lax
from jax.experimental import pallas as pl
from jax.experimental.pallas import tpu as pltpu

LANE = 128     # lane width: channel padding multiple (MXU K/N friendly)
SUBLANE = 8    # sublane width: W padding / H-strip multiple


def _round_up(x, m):
    return (x + m - 1) // m * m


def _cdiv(a, b):
    return -(-a // b)


def _sepconv_kernel(x_ref, dw_ref, midb_ref, pw_ref, bias_ref, out_ref, mid_ref, *,
                    kh, kw, stride, dilation, strip_rows, n_strips, wout_pad,
                    n_cblocks, activate_first):
    """One (batch, H-tile) grid step.

    x_ref   : (tile_in_rows, wp2, c_pad) bf16   overlapping input tile (incl. halo)
    dw_ref  : (kh, kw, c_pad) f32               depthwise weights, BN1 scale folded
    midb_ref: (1, c_pad) f32                    BN1 bias (used only if !activate_first)
    pw_ref  : (c_pad, cout_pad) bf16            pointwise weights, BN2 scale folded
    bias_ref: (1, cout_pad) f32                 folded output bias
    out_ref : (tile_h, wout_pad, cout_pad) f32
    mid_ref : (tile_h, wout_pad, c_pad) bf16    depthwise output staging (VMEM scratch)
    """
    tile_h = n_strips * strip_rows
    c_pad = n_cblocks * LANE
    cout_pad = out_ref.shape[-1]
    strip_in_rows = (strip_rows - 1) * stride + (kh - 1) * dilation + 1

    # Hoist loop-invariant weights: read + sublane-broadcast once per grid step
    # (JAX does not CSE broadcast_in_dim, so never do this inside the tap loop).
    dw_b = jnp.broadcast_to(dw_ref[...][:, :, None, :], (kh, kw, wout_pad, c_pad))
    bias = bias_ref[...]
    if not activate_first:
        midb_b = jnp.broadcast_to(midb_ref[...].reshape(1, 1, c_pad),
                                  (1, wout_pad, c_pad))

    def strip_body(s, carry):
        r0 = s * strip_rows
        in_r0 = r0 * stride
        if n_strips > 1:                       # dynamic (fori) path: alignment hints
            r0 = pl.multiple_of(r0, strip_rows)
            in_r0 = pl.multiple_of(in_r0, strip_rows * stride)
        for cb in range(n_cblocks):
            c0 = cb * LANE
            # One contiguous load of the strip's receptive-field rows for this
            # 128-lane channel block; all tap slices below act on the value.
            slab = x_ref[pl.ds(in_r0, strip_in_rows), :, c0:c0 + LANE]
            if activate_first:
                slab = jnp.maximum(slab, 0)    # relu0 (ReLU after zero-pad is valid)
            # Depthwise taps accumulate into a register-resident f32 strip; the
            # strip is written to VMEM exactly once (no kh*kw read-modify-write).
            acc = jnp.zeros((strip_rows, wout_pad, LANE), jnp.float32)
            for dy in range(kh):
                for dx in range(kw):
                    y0 = dy * dilation
                    x0 = dx * dilation
                    # TODO(synk): for stride>1 the W slice is sublane-strided; a
                    # W->(W/stride, stride) relayout in the wrapper would avoid it.
                    patch = slab[y0:y0 + (strip_rows - 1) * stride + 1:stride,
                                 x0:x0 + (wout_pad - 1) * stride + 1:stride, :]
                    acc = acc + patch.astype(jnp.float32) * dw_b[dy, dx, :, c0:c0 + LANE]
            if not activate_first:
                acc = jnp.maximum(acc + midb_b[:, :, c0:c0 + LANE], 0.0)  # BN1 bias+relu1
            mid_ref[pl.ds(r0, strip_rows), :, c0:c0 + LANE] = acc.astype(jnp.bfloat16)
        return carry

    if n_strips == 1:
        strip_body(0, 0)
    else:
        lax.fori_loop(0, n_strips, strip_body, 0)

    # Pointwise 1x1 conv over the whole tile: one MXU matmul with a large
    # M = tile_h * wout_pad (bf16 inputs, f32 accumulation).
    lhs = mid_ref[...].reshape(tile_h * wout_pad, c_pad)
    z = jnp.dot(lhs, pw_ref[...], preferred_element_type=jnp.float32)
    z = z + bias                               # folded BN bias
    if not activate_first:
        z = jnp.maximum(z, 0.0)                # relu2
    out_ref[...] = z.reshape(tile_h, wout_pad, cout_pad).astype(out_ref.dtype)


def separable_conv2d(x_nchw, dw_weight, pw_weight,
                     bn1_gamma, bn1_beta, bn1_mean, bn1_var,
                     bn2_gamma, bn2_beta, bn2_mean, bn2_var,
                     *, stride=1, padding=0, dilation=1, eps=1e-5,
                     activate_first=True, tile_h=None, interpret=False):
    """x_nchw: (N, C, H, W) float32 -> (N, Cout, Hout, Wout) float32."""
    f32 = jnp.float32
    n, c, h, w = x_nchw.shape
    cout = pw_weight.shape[0]                       # pointwise: (Cout, C, 1, 1)
    kh, kw = int(dw_weight.shape[2]), int(dw_weight.shape[3])  # depthwise (C,1,kh,kw)
    rf_h = (kh - 1) * dilation + 1
    rf_w = (kw - 1) * dilation + 1

    hout = (h + 2 * padding - rf_h) // stride + 1
    wout = (w + 2 * padding - rf_w) // stride + 1

    c_pad = _round_up(c, LANE)
    cout_pad = _round_up(cout, LANE)
    # TODO(synk): for layers with C << 128 (like this small test config) most
    # lanes are zero work; a W-into-lanes depthwise layout would fix that.
    wout_pad = _round_up(wout, SUBLANE)             # sublane-aligned matmul rows
    wp2 = _round_up((wout_pad - 1) * stride + rf_w, SUBLANE)

    # ---- generation-aware VMEM budget (v5e/v6e: 128 MiB, v7x: 64 MiB) --------
    try:
        vmem_cap = int(pltpu.get_tpu_info().vmem_capacity_bytes)
    except Exception:
        vmem_cap = 64 << 20                         # conservative default
    if vmem_cap >= (100 << 20):                     # v5e / v6e
        budget, vmem_clamp = 44 << 20, 100 << 20
    else:                                           # v7x (64 MiB physical)
        budget, vmem_clamp = 20 << 20, 48 << 20

    dw_bytes = kh * kw * c_pad * 4
    pw_bytes = c_pad * cout_pad * 2
    bias_bytes = (c_pad + cout_pad) * 4
    weight_bytes = dw_bytes + pw_bytes + bias_bytes

    def tile_footprint(t):
        # Per-grid-step VMEM: double-buffered in/out tiles + staging scratch +
        # in-kernel temporaries (matmul LHS/result, hoisted weight broadcast,
        # per-strip slab + accumulator) + double-buffered weights.
        tin = (t - 1) * stride + rf_h
        in_tile = tin * wp2 * c_pad * 2             # bf16 input tile
        out_tile = t * wout_pad * cout_pad * 4
        mid = t * wout_pad * c_pad * 2              # bf16 depthwise staging scratch
        lhs_tmp = t * wout_pad * c_pad * 2
        z_tmp = t * wout_pad * cout_pad * 4
        dwb_tmp = kh * kw * wout_pad * c_pad * 4
        sin = (SUBLANE - 1) * stride + rf_h
        strip_tmp = sin * wp2 * LANE * 2 + 2 * SUBLANE * wout_pad * LANE * 4
        return (2 * (in_tile + out_tile) + mid + lhs_tmp + z_tmp + dwb_tmp
                + strip_tmp + 2 * weight_bytes)

    if tile_h is None:
        tile_h = SUBLANE
        t = SUBLANE
        max_tile = _round_up(hout, SUBLANE)
        while t <= max_tile:
            if tile_footprint(t) <= budget:
                tile_h = t
            t += SUBLANE
        # v7x megacore: keep >= 2 grid steps so the 'parallel' axes shard over
        # both TensorCores (no-op on single-TC v5e/v6e).
        if n == 1 and _cdiv(hout, tile_h) == 1 and tile_h > SUBLANE:
            tile_h = _round_up(_cdiv(tile_h, 2), SUBLANE)
    assert tile_h % SUBLANE == 0 and tile_h > 0
    ht = _cdiv(hout, tile_h)
    hout_pad = ht * tile_h
    tile_in_rows = (tile_h - 1) * stride + rf_h
    need_rows = (hout_pad - 1) * stride + rf_h
    n_strips = tile_h // SUBLANE

    # ---- BN folding (inference mode, running stats) ---------------------------
    # TODO(synk): training-mode batch statistics are not computed here.
    s1 = (bn1_gamma / jnp.sqrt(bn1_var + eps)).astype(f32)
    b1 = (bn1_beta - bn1_mean * s1).astype(f32)
    s2 = (bn2_gamma / jnp.sqrt(bn2_var + eps)).astype(f32)
    b2 = (bn2_beta - bn2_mean * s2).astype(f32)

    dw_hwc = jnp.transpose(dw_weight[:, 0, :, :], (1, 2, 0)).astype(f32)  # (kh,kw,C)
    pw_co = jnp.transpose(pw_weight[:, :, 0, 0], (1, 0)).astype(f32)      # (C,Cout)

    dw_fold = dw_hwc * s1[None, None, :]            # BN1 scale -> depthwise weights
    pw_fold = pw_co * s2[None, :]                   # BN2 scale -> pointwise weights
    if activate_first:
        out_bias = (b1 @ pw_co) * s2 + b2           # BN1 bias pushed through pointwise
        mid_bias = jnp.zeros((c,), f32)             # unused in this mode
    else:
        out_bias = b2                               # BN1 bias applied before relu1
        mid_bias = b1

    dw_p = jnp.zeros((kh, kw, c_pad), f32).at[:, :, :c].set(dw_fold)
    pw_p = jnp.zeros((c_pad, cout_pad), f32).at[:c, :cout].set(pw_fold)
    pw_p = pw_p.astype(jnp.bfloat16)
    midb_p = jnp.zeros((1, c_pad), f32).at[0, :c].set(mid_bias)
    bias_p = jnp.zeros((1, cout_pad), f32).at[0, :cout].set(out_bias)

    # ---- input layout: NCHW -> NHWC bf16, zero-pad, lane-pad channels ---------
    # bf16 activations halve the dominant HBM/DMA stream; accumulation stays f32.
    x_nhwc = jnp.transpose(x_nchw, (0, 2, 3, 1)).astype(jnp.bfloat16)
    pad_bottom = max(0, need_rows - padding - h)
    pad_right = max(0, wp2 - padding - w)
    x_pad = jnp.pad(x_nhwc, ((0, 0), (padding, pad_bottom),
                             (padding, pad_right), (0, c_pad - c)))
    x_pad = x_pad[:, :, :wp2, :]
    # Overlapping H tiles (tile + halo rows) are pre-materialized here so every
    # BlockSpec stays plain Blocked and the kernel never concatenates halo rows.
    # TODO(synk): a split-tap kernel reading a separate tiny halo array would
    # avoid duplicating the halo rows in HBM for very large inputs.
    x_tiles = jnp.stack(
        [lax.slice_in_dim(x_pad, i * tile_h * stride,
                          i * tile_h * stride + tile_in_rows, axis=1)
         for i in range(ht)], axis=1)               # (N, ht, tile_in_rows, wp2, c_pad)

    vmem_limit = int(min(vmem_clamp,
                         max(32 << 20, tile_footprint(tile_h) + (8 << 20))))
    flops = 2 * n * hout_pad * wout_pad * c_pad * (kh * kw + cout_pad)
    bytes_accessed = int(x_tiles.size * 2 + n * hout_pad * wout_pad * cout_pad * 4
                         + dw_bytes + pw_bytes + bias_bytes)

    kernel = functools.partial(
        _sepconv_kernel, kh=kh, kw=kw, stride=stride, dilation=dilation,
        strip_rows=SUBLANE, n_strips=n_strips, wout_pad=wout_pad,
        n_cblocks=c_pad // LANE, activate_first=activate_first)

    out_nhwc = pl.pallas_call(
        kernel,
        out_shape=jax.ShapeDtypeStruct((n, hout_pad, wout_pad, cout_pad), f32),
        grid=(n, ht),
        in_specs=[
            # overlapping input tile for this (batch, H-tile) grid step
            # TODO(synk): on v5e consider pipeline_mode=pl.Buffered(3) here.
            pl.BlockSpec((None, None, tile_in_rows, wp2, c_pad),
                         lambda b, i: (b, i, 0, 0, 0)),
            # loop-invariant weights / biases: constant index_map => fetched once
            pl.BlockSpec((kh, kw, c_pad), lambda b, i: (0, 0, 0)),
            pl.BlockSpec((1, c_pad), lambda b, i: (0, 0)),
            pl.BlockSpec((c_pad, cout_pad), lambda b, i: (0, 0)),
            pl.BlockSpec((1, cout_pad), lambda b, i: (0, 0)),
        ],
        out_specs=pl.BlockSpec((None, tile_h, wout_pad, cout_pad),
                               lambda b, i: (b, i, 0, 0)),
        scratch_shapes=[pltpu.VMEM((tile_h, wout_pad, c_pad), jnp.bfloat16)],
        compiler_params=pltpu.CompilerParams(
            dimension_semantics=("parallel", "parallel"),
            vmem_limit_bytes=vmem_limit),
        cost_estimate=pl.CostEstimate(flops=flops, transcendentals=0,
                                      bytes_accessed=bytes_accessed),
        interpret=interpret,
    )(x_tiles, dw_p, midb_p, pw_p, bias_p)

    out = out_nhwc[:, :hout, :wout, :cout]
    # TODO(synk): downstream NHWC consumers should take `out` directly and skip
    # this extra transpose pass (kept to match the PyTorch NCHW contract).
    return jnp.transpose(out, (0, 3, 1, 2))


def _reference(x_nchw, dw_weight, pw_weight,
               bn1_gamma, bn1_beta, bn1_mean, bn1_var,
               bn2_gamma, bn2_beta, bn2_mean, bn2_var,
               *, stride=1, padding=0, dilation=1, eps=1e-5, activate_first=True):
    """Pure-JAX reference (NCHW), mirrors the PyTorch forward."""
    c = x_nchw.shape[1]
    x = jnp.maximum(x_nchw, 0.0) if activate_first else x_nchw
    y = lax.conv_general_dilated(
        x, dw_weight, window_strides=(stride, stride),
        padding=[(padding, padding), (padding, padding)],
        rhs_dilation=(dilation, dilation), feature_group_count=c,
        dimension_numbers=('NCHW', 'OIHW', 'NCHW'))
    y = (y - bn1_mean[None, :, None, None]) / jnp.sqrt(bn1_var + eps)[None, :, None, None]
    y = y * bn1_gamma[None, :, None, None] + bn1_beta[None, :, None, None]
    if not activate_first:
        y = jnp.maximum(y, 0.0)
    z = lax.conv_general_dilated(
        y, pw_weight, window_strides=(1, 1), padding=[(0, 0), (0, 0)],
        dimension_numbers=('NCHW', 'OIHW', 'NCHW'))
    z = (z - bn2_mean[None, :, None, None]) / jnp.sqrt(bn2_var + eps)[None, :, None, None]
    z = z * bn2_gamma[None, :, None, None] + bn2_beta[None, :, None, None]
    if not activate_first:
        z = jnp.maximum(z, 0.0)
    return z


if __name__ == "__main__":
    # Small deterministic config: batch=2, C_in=4, C_out=8, 16x16 spatial,
    # 3x3 depthwise kernel, stride=1, padding=1, dilation=1.
    N, C, COUT, H, W = 2, 4, 8, 16, 16
    KH = KW = 3
    STRIDE, PAD, DIL = 1, 1, 1

    key = jax.random.PRNGKey(0)
    ks = jax.random.split(key, 11)

    x = jax.random.normal(ks[0], (N, C, H, W), jnp.float32)
    dw_weight = jax.random.normal(ks[1], (C, 1, KH, KW), jnp.float32) * 0.2
    pw_weight = jax.random.normal(ks[2], (COUT, C, 1, 1), jnp.float32) * 0.2

    bn1_gamma = 1.0 + 0.1 * jax.random.normal(ks[3], (C,), jnp.float32)
    bn1_beta = 0.1 * jax.random.normal(ks[4], (C,), jnp.float32)
    bn1_mean = 0.05 * jax.random.normal(ks[5], (C,), jnp.float32)
    bn1_var = jnp.abs(jax.random.normal(ks[6], (C,), jnp.float32)) + 0.5

    bn2_gamma = 1.0 + 0.1 * jax.random.normal(ks[7], (COUT,), jnp.float32)
    bn2_beta = 0.1 * jax.random.normal(ks[8], (COUT,), jnp.float32)
    bn2_mean = 0.05 * jax.random.normal(ks[9], (COUT,), jnp.float32)
    bn2_var = jnp.abs(jax.random.normal(ks[10], (COUT,), jnp.float32)) + 0.5

    args = (x, dw_weight, pw_weight,
            bn1_gamma, bn1_beta, bn1_mean, bn1_var,
            bn2_gamma, bn2_beta, bn2_mean, bn2_var)

    for activate_first in (True, False):
        ref = _reference(*args, stride=STRIDE, padding=PAD, dilation=DIL,
                         activate_first=activate_first)
        ref = np.asarray(jax.block_until_ready(ref))
        # tile_h=None: auto picker (single H-tile, 2 strips, fori path)
        # tile_h=8   : forces ht=2 grid steps (exercises H tiling / halo overlap)
        for th in (None, 8):
            out = separable_conv2d(*args, stride=STRIDE, padding=PAD, dilation=DIL,
                                   activate_first=activate_first, tile_h=th)
            out = jax.block_until_ready(out)
            # bf16 activations + bf16 MXU pointwise => looser tolerance than f32.
            np.testing.assert_allclose(np.asarray(out), ref, rtol=5e-2, atol=5e-2)
            assert out.shape == (N, COUT, H, W)

    print("KERNEL_OK")
</pallas_src>

<mosaic_0001>
module attributes {stable_mosaic.version = 11 : i64} {
  func.func @_sepconv_kernel(%arg0: i32, %arg1: i32, %arg2: memref<1x1x18x24x128xbf16, #tpu.memory_space<vmem>>, %arg3: memref<3x3x128xf32, #tpu.memory_space<vmem>>, %arg4: memref<1x128xf32, #tpu.memory_space<vmem>>, %arg5: memref<128x128xbf16, #tpu.memory_space<vmem>>, %arg6: memref<1x128xf32, #tpu.memory_space<vmem>>, %arg7: memref<1x16x16x128xf32, #tpu.memory_space<vmem>>, %arg8: memref<16x16x128xbf16, #tpu.memory_space<vmem>>) attributes {dimension_semantics = [#tpu.dimension_semantics<parallel>, #tpu.dimension_semantics<parallel>], iteration_bounds = array<i64: 2, 1>, scalar_prefetch = 0 : i64, scratch_operands = 1 : i64, tpu.core_type = #tpu.core_type<tc>, window_params = [{transform_indices = @transform_0, window_bounds = array<i64: 1, 1, 18, 24, 128>}, {pipeline_mode = #tpu.pipeline_mode<synchronous>, transform_indices = @transform_1, window_bounds = array<i64: 3, 3, 128>}, {pipeline_mode = #tpu.pipeline_mode<synchronous>, transform_indices = @transform_2, window_bounds = array<i64: 1, 128>}, {pipeline_mode = #tpu.pipeline_mode<synchronous>, transform_indices = @transform_3, window_bounds = array<i64: 128, 128>}, {pipeline_mode = #tpu.pipeline_mode<synchronous>, transform_indices = @transform_4, window_bounds = array<i64: 1, 128>}, {transform_indices = @transform_5, window_bounds = array<i64: 1, 16, 16, 128>}]} {
    %c0 = arith.constant 0 : index
    %c0_0 = arith.constant 0 : index
    %c0_1 = arith.constant 0 : index
    %0 = vector.load %arg3[%c0, %c0_0, %c0_1] : memref<3x3x128xf32, #tpu.memory_space<vmem>>, vector<3x3x128xf32>
    %1 = vector.shape_cast %0 : vector<3x3x128xf32> to vector<3x3x1x128xf32>
    %2 = vector.shape_cast %1 : vector<3x3x1x128xf32> to vector<3x3x1x128xf32>
    %3 = vector.broadcast %2 : vector<3x3x1x128xf32> to vector<3x3x16x128xf32>
    %c0_2 = arith.constant 0 : index
    %c0_3 = arith.constant 0 : index
    %4 = vector.load %arg6[%c0_2, %c0_3] : memref<1x128xf32, #tpu.memory_space<vmem>>, vector<1x128xf32>
    %c0_i32 = arith.constant 0 : i32
    %c2_i32 = arith.constant 2 : i32
    %5 = arith.addi %c0_i32, %c2_i32 : i32
    %c1_i32 = arith.constant 1 : i32
    scf.for %arg9 = %c0_i32 to %5 step %c1_i32  : i32 {
      %c8_i32 = arith.constant 8 : i32
      %16 = arith.muli %arg9, %c8_i32 : i32
      %c1_i32_14 = arith.constant 1 : i32
      %17 = arith.muli %16, %c1_i32_14 : i32
      %18 = tpu.assume_multiple %16, 8 : i32
      %19 = tpu.assume_multiple %17, 8 : i32
      %c0_15 = arith.constant 0 : index
      %c0_16 = arith.constant 0 : index
      %20 = arith.index_cast %19 : i32 to index
      %c0_17 = arith.constant 0 : index
      %c0_18 = arith.constant 0 : index
      %21 = vector.load %arg2[%c0_15, %c0_16, %20, %c0_17, %c0_18] : memref<1x1x18x24x128xbf16, #tpu.memory_space<vmem>>, vector<1x1x10x24x128xbf16>
      %22 = vector.shape_cast %21 : vector<1x1x10x24x128xbf16> to vector<10x24x128xbf16>
      %cst_19 = arith.constant 0.000000e+00 : bf16
      %23 = vector.broadcast %cst_19 : bf16 to vector<10x24x128xbf16>
      %24 = arith.maximumf %22, %23 : vector<10x24x128xbf16>
      %cst_20 = arith.constant 0.000000e+00 : f32
      %25 = vector.broadcast %cst_20 : f32 to vector<8x16x128xf32>
      %26 = vector.extract_strided_slice %24 {offsets = [0, 0, 0], sizes = [8, 16, 128], strides = [1, 1, 1]} : vector<10x24x128xbf16> to vector<8x16x128xbf16>
      %27 = arith.extf %26 : vector<8x16x128xbf16> to vector<8x16x128xf32>
      %28 = vector.extract_strided_slice %3 {offsets = [0, 0, 0, 0], sizes = [1, 1, 16, 128], strides = [1, 1, 1, 1]} : vector<3x3x16x128xf32> to vector<1x1x16x128xf32>
      %29 = vector.shape_cast %28 : vector<1x1x16x128xf32> to vector<16x128xf32>
      %30 = vector.shape_cast %29 : vector<16x128xf32> to vector<1x16x128xf32>
      %31 = vector.broadcast %30 : vector<1x16x128xf32> to vector<8x16x128xf32>
      %32 = arith.mulf %27, %31 : vector<8x16x128xf32>
      %33 = arith.addf %25, %32 : vector<8x16x128xf32>
      %34 = vector.extract_strided_slice %24 {offsets = [0, 1, 0], sizes = [8, 16, 128], strides = [1, 1, 1]} : vector<10x24x128xbf16> to vector<8x16x128xbf16>
      %35 = arith.extf %34 : vector<8x16x128xbf16> to vector<8x16x128xf32>
      %36 = vector.extract_strided_slice %3 {offsets = [0, 1, 0, 0], sizes = [1, 1, 16, 128], strides = [1, 1, 1, 1]} : vector<3x3x16x128xf32> to vector<1x1x16x128xf32>
      %37 = vector.shape_cast %36 : vector<1x1x16x128xf32> to vector<16x128xf32>
      %38 = vector.shape_cast %37 : vector<16x128xf32> to vector<1x16x128xf32>
      %39 = vector.broadcast %38 : vector<1x16x128xf32> to vector<8x16x128xf32>
      %40 = arith.mulf %35, %39 : vector<8x16x128xf32>
      %41 = arith.addf %33, %40 : vector<8x16x128xf32>
      %42 = vector.extract_strided_slice %24 {offsets = [0, 2, 0], sizes = [8, 16, 128], strides = [1, 1, 1]} : vector<10x24x128xbf16> to vector<8x16x128xbf16>
      %43 = arith.extf %42 : vector<8x16x128xbf16> to vector<8x16x128xf32>
      %44 = vector.extract_strided_slice %3 {offsets = [0, 2, 0, 0], sizes = [1, 1, 16, 128], strides = [1, 1, 1, 1]} : vector<3x3x16x128xf32> to vector<1x1x16x128xf32>
      %45 = vector.shape_cast %44 : vector<1x1x16x128xf32> to vector<16x128xf32>
      %46 = vector.shape_cast %45 : vector<16x128xf32> to vector<1x16x128xf32>
      %47 = vector.broadcast %46 : vector<1x16x128xf32> to vector<8x16x128xf32>
      %48 = arith.mulf %43, %47 : vector<8x16x128xf32>
      %49 = arith.addf %41, %48 : vector<8x16x128xf32>
      %50 = vector.extract_strided_slice %24 {offsets = [1, 0, 0], sizes = [8, 16, 128], strides = [1, 1, 1]} : vector<10x24x128xbf16> to vector<8x16x128xbf16>
      %51 = arith.extf %50 : vector<8x16x128xbf16> to vector<8x16x128xf32>
      %52 = vector.extract_strided_slice %3 {offsets = [1, 0, 0, 0], sizes = [1, 1, 16, 128], strides = [1, 1, 1, 1]} : vector<3x3x16x128xf32> to vector<1x1x16x128xf32>
      %53 = vector.shape_cast %52 : vector<1x1x16x128xf32> to vector<16x128xf32>
      %54 = vector.shape_cast %53 : vector<16x128xf32> to vector<1x16x128xf32>
      %55 = vector.broadcast %54 : vector<1x16x128xf32> to vector<8x16x128xf32>
      %56 = arith.mulf %51, %55 : vector<8x16x128xf32>
      %57 = arith.addf %49, %56 : vector<8x16x128xf32>
      %58 = vector.extract_strided_slice %24 {offsets = [1, 1, 0], sizes = [8, 16, 128], strides = [1, 1, 1]} : vector<10x24x128xbf16> to vector<8x16x128xbf16>
      %59 = arith.extf %58 : vector<8x16x128xbf16> to vector<8x16x128xf32>
      %60 = vector.extract_strided_slice %3 {offsets = [1, 1, 0, 0], sizes = [1, 1, 16, 128], strides = [1, 1, 1, 1]} : vector<3x3x16x128xf32> to vector<1x1x16x128xf32>
      %61 = vector.shape_cast %60 : vector<1x1x16x128xf32> to vector<16x128xf32>
      %62 = vector.shape_cast %61 : vector<16x128xf32> to vector<1x16x128xf32>
      %63 = vector.broadcast %62 : vector<1x16x128xf32> to vector<8x16x128xf32>
      %64 = arith.mulf %59, %63 : vector<8x16x128xf32>
      %65 = arith.addf %57, %64 : vector<8x16x128xf32>
      %66 = vector.extract_strided_slice %24 {offsets = [1, 2, 0], sizes = [8, 16, 128], strides = [1, 1, 1]} : vector<10x24x128xbf16> to vector<8x16x128xbf16>
      %67 = arith.extf %66 : vector<8x16x128xbf16> to vector<8x16x128xf32>
      %68 = vector.extract_strided_slice %3 {offsets = [1, 2, 0, 0], sizes = [1, 1, 16, 128], strides = [1, 1, 1, 1]} : vector<3x3x16x128xf32> to vector<1x1x16x128xf32>
      %69 = vector.shape_cast %68 : vector<1x1x16x128xf32> to vector<16x128xf32>
      %70 = vector.shape_cast %69 : vector<16x128xf32> to vector<1x16x128xf32>
      %71 = vector.broadcast %70 : vector<1x16x128xf32> to vector<8x16x128xf32>
      %72 = arith.mulf %67, %71 : vector<8x16x128xf32>
      %73 = arith.addf %65, %72 : vector<8x16x128xf32>
      %74 = vector.extract_strided_slice %24 {offsets = [2, 0, 0], sizes = [8, 16, 128], strides = [1, 1, 1]} : vector<10x24x128xbf16> to vector<8x16x128xbf16>
      %75 = arith.extf %74 : vector<8x16x128xbf16> to vector<8x16x128xf32>
      %76 = vector.extract_strided_slice %3 {offsets = [2, 0, 0, 0], sizes = [1, 1, 16, 128], strides = [1, 1, 1, 1]} : vector<3x3x16x128xf32> to vector<1x1x16x128xf32>
      %77 = vector.shape_cast %76 : vector<1x1x16x128xf32> to vector<16x128xf32>
      %78 = vector.shape_cast %77 : vector<16x128xf32> to vector<1x16x128xf32>
      %79 = vector.broadcast %78 : vector<1x16x128xf32> to vector<8x16x128xf32>
      %80 = arith.mulf %75, %79 : vector<8x16x128xf32>
      %81 = arith.addf %73, %80 : vector<8x16x128xf32>
      %82 = vector.extract_strided_slice %24 {offsets = [2, 1, 0], sizes = [8, 16, 128], strides = [1, 1, 1]} : vector<10x24x128xbf16> to vector<8x16x128xbf16>
      %83 = arith.extf %82 : vector<8x16x128xbf16> to vector<8x16x128xf32>
      %84 = vector.extract_strided_slice %3 {offsets = [2, 1, 0, 0], sizes = [1, 1, 16, 128], strides = [1, 1, 1, 1]} : vector<3x3x16x128xf32> to vector<1x1x16x128xf32>
      %85 = vector.shape_cast %84 : vector<1x1x16x128xf32> to vector<16x128xf32>
      %86 = vector.shape_cast %85 : vector<16x128xf32> to vector<1x16x128xf32>
      %87 = vector.broadcast %86 : vector<1x16x128xf32> to vector<8x16x128xf32>
      %88 = arith.mulf %83, %87 : vector<8x16x128xf32>
      %89 = arith.addf %81, %88 : vector<8x16x128xf32>
      %90 = vector.extract_strided_slice %24 {offsets = [2, 2, 0], sizes = [8, 16, 128], strides = [1, 1, 1]} : vector<10x24x128xbf16> to vector<8x16x128xbf16>
      %91 = arith.extf %90 : vector<8x16x128xbf16> to vector<8x16x128xf32>
      %92 = vector.extract_strided_slice %3 {offsets = [2, 2, 0, 0], sizes = [1, 1, 16, 128], strides = [1, 1, 1, 1]} : vector<3x3x16x128xf32> to vector<1x1x16x128xf32>
      %93 = vector.shape_cast %92 : vector<1x1x16x128xf32> to vector<16x128xf32>
      %94 = vector.shape_cast %93 : vector<16x128xf32> to vector<1x16x128xf32>
      %95 = vector.broadcast %94 : vector<1x16x128xf32> to vector<8x16x128xf32>
      %96 = arith.mulf %91, %95 : vector<8x16x128xf32>
      %97 = arith.addf %89, %96 : vector<8x16x128xf32>
      %98 = arith.truncf %97 : vector<8x16x128xf32> to vector<8x16x128xbf16>
      %99 = arith.index_cast %18 : i32 to index
      %c0_21 = arith.constant 0 : index
      %c0_22 = arith.constant 0 : index
      %100 = vector.load %arg8[%99, %c0_21, %c0_22] : memref<16x16x128xbf16, #tpu.memory_space<vmem>>, vector<8x16x128xbf16>
      tpu.vector_store %arg8[%99, %c0_21, %c0_22], %98 {strides = array<i32>} : memref<16x16x128xbf16, #tpu.memory_space<vmem>>, vector<8x16x128xbf16>,
    }
    %c2_i32_4 = arith.constant 2 : i32
    %c0_5 = arith.constant 0 : index
    %c0_6 = arith.constant 0 : index
    %c0_7 = arith.constant 0 : index
    %6 = vector.load %arg8[%c0_5, %c0_6, %c0_7] : memref<16x16x128xbf16, #tpu.memory_space<vmem>>, vector<16x16x128xbf16>
    %7 = vector.shape_cast %6 : vector<16x16x128xbf16> to vector<256x128xbf16>
    %c0_8 = arith.constant 0 : index
    %c0_9 = arith.constant 0 : index
    %8 = vector.load %arg5[%c0_8, %c0_9] : memref<128x128xbf16, #tpu.memory_space<vmem>>, vector<128x128xbf16>
    %cst = arith.constant dense<0.000000e+00> : vector<256x128xf32>
    %9 = tpu.matmul %7, %8, %cst {dimension_numbers = #tpu.dot_dimension_numbers<[1], [0], [0], [1], [0, 0, 1, 1], [], []>} : vector<256x128xbf16>, vector<128x128xbf16>, vector<256x128xf32> -> vector<256x128xf32>
    %10 = vector.broadcast %4 : vector<1x128xf32> to vector<256x128xf32>
    %11 = arith.addf %9, %10 : vector<256x128xf32>
    %12 = vector.shape_cast %11 : vector<256x128xf32> to vector<16x16x128xf32>
    %c0_10 = arith.constant 0 : index
    %c0_11 = arith.constant 0 : index
    %c0_12 = arith.constant 0 : index
    %c0_13 = arith.constant 0 : index
    %13 = vector.load %arg7[%c0_10, %c0_11, %c0_12, %c0_13] : memref<1x16x16x128xf32, #tpu.memory_space<vmem>>, vector<1x16x16x128xf32>
    %14 = vector.shape_cast %13 : vector<1x16x16x128xf32> to vector<16x16x128xf32>
    %15 = vector.shape_cast %12 : vector<16x16x128xf32> to vector<1x16x16x128xf32>
    tpu.vector_store %arg7[%c0_10, %c0_11, %c0_12, %c0_13], %15 {strides = array<i32>} : memref<1x16x16x128xf32, #tpu.memory_space<vmem>>, vector<1x16x16x128xf32>,
    return
  }
  func.func @transform_0(%arg0: i32, %arg1: i32) -> (i32, i32, i32, i32, i32) {
    %c0_i32 = arith.constant 0 : i32
    %c0_i32_0 = arith.constant 0 : i32
    %c0_i32_1 = arith.constant 0 : i32
    %c0_i32_2 = arith.constant 0 : i32
    return %arg0, %arg1, %c0_i32, %c0_i32_0, %c0_i32_1 : i32, i32, i32, i32, i32
  }
  func.func @transform_1(%arg0: i32, %arg1: i32) -> (i32, i32, i32) {
    %c0_i32 = arith.constant 0 : i32
    %c0_i32_0 = arith.constant 0 : i32
    %c0_i32_1 = arith.constant 0 : i32
    %c0_i32_2 = arith.constant 0 : i32
    return %c0_i32, %c0_i32_0, %c0_i32_1 : i32, i32, i32
  }
  func.func @transform_2(%arg0: i32, %arg1: i32) -> (i32, i32) {
    %c0_i32 = arith.constant 0 : i32
    %c0_i32_0 = arith.constant 0 : i32
    %c0_i32_1 = arith.constant 0 : i32
    return %c0_i32, %c0_i32_0 : i32, i32
  }
  func.func @transform_3(%arg0: i32, %arg1: i32) -> (i32, i32) {
    %c0_i32 = arith.constant 0 : i32
    %c0_i32_0 = arith.constant 0 : i32
    %c0_i32_1 = arith.constant 0 : i32
    return %c0_i32, %c0_i32_0 : i32, i32
  }
  func.func @transform_4(%arg0: i32, %arg1: i32) -> (i32, i32) {
    %c0_i32 = arith.constant 0 : i32
    %c0_i32_0 = arith.constant 0 : i32
    %c0_i32_1 = arith.constant 0 : i32
    return %c0_i32, %c0_i32_0 : i32, i32
  }
  func.func @transform_5(%arg0: i32, %arg1: i32) -> (i32, i32, i32, i32) {
    %c0_i32 = arith.constant 0 : i32
    %c0_i32_0 = arith.constant 0 : i32
    %c0_i32_1 = arith.constant 0 : i32
    return %arg0, %arg1, %c0_i32, %c0_i32_0 : i32, i32, i32, i32
  }
}

</mosaic_0001>

<llo_original>
// kernel: tpu_custom_call.1
$region0: #{tpu_custom_call.1}
  #allocation0 [shape = 'u32[]', space=smem, size = 0x4, offset = 0x4, fixed_abs, tag = 'smem constant byte address 0x4 - core index']
  #allocation1 [shape = 'u32[144,128]{1,0:T(1,128)}', space=vmem, size = 0x12000, scoped, tag = 'internal scratch']
  #allocation2 [shape = 'bf16[16,16,128]{2,1,0:T(16,128)(2,1)}', space=vmem, size = 0x10000, scoped, tag = 'scratch operand']
  %s0 = inlined_call_operand.hbm [shape: bf16[2,1,18,24,128], index: 0, kind: input, shape index: {}]
  %s1 = inlined_call_operand.hbm [shape: f32[3,3,128], index: 1, kind: input, shape index: {}]
  %s2 = inlined_call_operand.vmem [shape: f32[1,128], index: 2, kind: input, shape index: {}]
  %s3 = inlined_call_operand.hbm [shape: bf16[128,128], index: 3, kind: input, shape index: {}]
  %s4 = inlined_call_operand.vmem [shape: f32[1,128], index: 4, kind: input, shape index: {}]
  %s5 = inlined_call_operand.hbm [shape: f32[2,16,16,128], index: 5, kind: output, shape index: {}]
  %s6 = sld [smem:[#allocation0]]
  $region72: #{tpu_custom_call.1} parent=0
    _
  %s8 = ssub.s32 1, %s6
  %s9 = scalar_select 0, %s8, %s6
  $region1: #{tpu_custom_call.1} parent=0
    #allocation3 [shape = 'u8[221184]{0}', space=vmem, size = 0x36000, scoped, tag = 'input window, operand 0']
    #allocation4 [shape = 's32[2]{0}', space=sflag, size = 0x8, scoped, tag = 'scoped memory for tpu_custom_call.1']
    #allocation5 [shape = 's32[2]{0}', space=sflag, size = 0x8, scoped, tag = 'scoped memory for tpu_custom_call.1']
    #allocation6 [shape = 'u8[6144]{0}', space=vmem, size = 0x1800, scoped, tag = 'input window, operand 1, single buffered']
    #allocation7 [shape = 's32[1]{0}', space=sflag, size = 0x4, scoped, tag = 'scoped memory for tpu_custom_call.1']
    #allocation8 [shape = 'u8[32768]{0}', space=vmem, size = 0x8000, scoped, tag = 'input window, operand 3, single buffered']
    #allocation9 [shape = 'u8[262144]{0}', space=vmem, size = 0x40000, scoped, tag = 'output window, operand 0']
    %10 = vsyncpa [#allocation4], 0
    %s11 = scalar_lea.sflag [#allocation4], 1
    %12 = vsyncpa %s11, 0
    %13 = vsyncpa [#allocation7], 0
    %14 = vsyncpa [#allocation5], 0
    %s15 = scalar_lea.sflag [#allocation5], 1
    %16 = vsyncpa %s15, 0
    loop: start=0, step=1, limit=4
    $region2: #{tpu_custom_call.1} parent=1 // loop_pre_header
      _
    $region3: #{tpu_custom_call.1} parent=1 // loop_header
      %s18 = sphi 0, %s22
      %p19 = scmp.ge.s32.totalorder %s18, 4
      %s25 = sphi 0, %s37
      %s26 = sphi 0, %s33
      %s27 = sphi 0, %s25
      %s28 = sphi 0, %s26
      %s29 = sphi 0, %s27
      %s30 = sphi 0, %s28
      %s42 = sphi 0, %s44
      %s45 = sphi 0, %s42
      %s46 = sphi 0, %s45
      %s62 = sphi 0, %s46
      %s66 = sphi 0, %s66
      %s68 = sphi 0, %s66
      %s69 = sphi 0, %s68
      %s83 = sphi 0, %s69
      %s87 = sphi 0, %s87
      %s89 = sphi 0, %s87
      %s90 = sphi 0, %s89
      %s104 = sphi 0, %s90
      %s108 = sphi 0, %s108
      %s110 = sphi 0, %s108
      %s111 = sphi 0, %s110
      %s125 = sphi 0, %s111
      %s129 = sphi 0, %s129
      %s131 = sphi 0, %s129
      %s132 = sphi 0, %s131
      %s146 = sphi 0, %s132
      %s154 = sphi 0, %s156
      %s157 = sphi 0, %s154
      %s158 = sphi 0, %s157
      %s174 = sphi 0, %s158
    $region4: #{tpu_custom_call.1} parent=1 // loop_header_branch
      %21 = sbr.rel (%p19) target = $region8
    $region5: #{tpu_custom_call.1} parent=1 // loop_body
      %s23 = ssub.s32 %s18, 1
      %s24 = ssub.s32 %s18, 2
      %s31 = sadd.s32 1, %s26
      %p32 = scmp.ge.s32.totalorder %s31, 1
      %s33 = scalar_select %p32, 0, %s31
      %s34 = sadd.s32 1, %s25
      %s35 = scalar_select %p32, %s34, %s25
      %p36 = scmp.ge.s32.totalorder %s35, 2
      %s37 = scalar_select %p36, 0, %s35
      %s38 = ssub.s32 %s25, %s37
      %s39 = ssub.s32 %s26, %s33
      %s40 = sor.u32 %s38, %s39
      %p41 = scmp.eq.s32.totalorder %s40, 0
      %s43 = sadd.s32 %s42, 1
      %s44 = scalar_select %p41, %s42, %s43
      %p47 = pneg %p41
      %p48 = scmp.eq.s32.totalorder %s18, 1
      %p49 = por %p47, %p48
      %p50 = scmp.ne.s32.totalorder %s42, %s45
      %p51 = scmp.eq.s32.totalorder %s18, 0
      %p52 = por %p50, %p51
      %p53 = scmp.ne.s32.totalorder %s42, %s45
      %p54 = scmp.eq.s32.totalorder %s23, 1
      %p55 = por %p53, %p54
      %p56 = scmp.ne.s32.totalorder %s45, %s46
      %p57 = scmp.eq.s32.totalorder %s23, 0
      %p58 = por %p56, %p57
      %p59 = scmp.ne.s32.totalorder %s45, %s46
      %p60 = scmp.eq.s32.totalorder %s24, 1
      %p61 = por %p59, %p60
      %p63 = scmp.ne.s32.totalorder %s46, %s62
      %p64 = scmp.eq.s32.totalorder %s24, 0
      %p65 = por %p63, %p64
      %s67 = sadd.s32 %s66, 1
      %p70 = scmp.eq.s32.totalorder %s18, 1
      %p71 = scmp.ne.s32.totalorder %s66, %s68
      %p72 = scmp.eq.s32.totalorder %s18, 0
      %p73 = por %p71, %p72
      %p74 = scmp.ne.s32.totalorder %s66, %s68
      %p75 = scmp.eq.s32.totalorder %s23, 1
      %p76 = por %p74, %p75
      %p77 = scmp.ne.s32.totalorder %s68, %s69
      %p78 = scmp.eq.s32.totalorder %s23, 0
      %p79 = por %p77, %p78
      %p80 = scmp.ne.s32.totalorder %s68, %s69
      %p81 = scmp.eq.s32.totalorder %s24, 1
      %p82 = por %p80, %p81
      %p84 = scmp.ne.s32.totalorder %s69, %s83
      %p85 = scmp.eq.s32.totalorder %s24, 0
      %p86 = por %p84, %p85
      %s88 = sadd.s32 %s87, 1
      %p91 = scmp.eq.s32.totalorder %s18, 1
      %p92 = scmp.ne.s32.totalorder %s87, %s89
      %p93 = scmp.eq.s32.totalorder %s18, 0
      %p94 = por %p92, %p93
      %p95 = scmp.ne.s32.totalorder %s87, %s89
      %p96 = scmp.eq.s32.totalorder %s23, 1
      %p97 = por %p95, %p96
      %p98 = scmp.ne.s32.totalorder %s89, %s90
      %p99 = scmp.eq.s32.totalorder %s23, 0
      %p100 = por %p98, %p99
      %p101 = scmp.ne.s32.totalorder %s89, %s90
      %p102 = scmp.eq.s32.totalorder %s24, 1
      %p103 = por %p101, %p102
      %p105 = scmp.ne.s32.totalorder %s90, %s104
      %p106 = scmp.eq.s32.totalorder %s24, 0
      %p107 = por %p105, %p106
      %s109 = sadd.s32 %s108, 1
      %p112 = scmp.eq.s32.totalorder %s18, 1
      %p113 = scmp.ne.s32.totalorder %s108, %s110
      %p114 = scmp.eq.s32.totalorder %s18, 0
      %p115 = por %p113, %p114
      %p116 = scmp.ne.s32.totalorder %s108, %s110
      %p117 = scmp.eq.s32.totalorder %s23, 1
      %p118 = por %p116, %p117
      %p119 = scmp.ne.s32.totalorder %s110, %s111
      %p120 = scmp.eq.s32.totalorder %s23, 0
      %p121 = por %p119, %p120
      %p122 = scmp.ne.s32.totalorder %s110, %s111
      %p123 = scmp.eq.s32.totalorder %s24, 1
      %p124 = por %p122, %p123
      %p126 = scmp.ne.s32.totalorder %s111, %s125
      %p127 = scmp.eq.s32.totalorder %s24, 0
      %p128 = por %p126, %p127
      %s130 = sadd.s32 %s129, 1
      %p133 = scmp.eq.s32.totalorder %s18, 1
      %p134 = scmp.ne.s32.totalorder %s129, %s131
      %p135 = scmp.eq.s32.totalorder %s18, 0
      %p136 = por %p134, %p135
      %p137 = scmp.ne.s32.totalorder %s129, %s131
      %p138 = scmp.eq.s32.totalorder %s23, 1
      %p139 = por %p137, %p138
      %p140 = scmp.ne.s32.totalorder %s131, %s132
      %p141 = scmp.eq.s32.totalorder %s23, 0
      %p142 = por %p140, %p141
      %p143 = scmp.ne.s32.totalorder %s131, %s132
      %p144 = scmp.eq.s32.totalorder %s24, 1
      %p145 = por %p143, %p144
      %p147 = scmp.ne.s32.totalorder %s132, %s146
      %p148 = scmp.eq.s32.totalorder %s24, 0
      %p149 = por %p147, %p148
      %s150 = ssub.s32 %s25, %s37
      %s151 = ssub.s32 %s26, %s33
      %s152 = sor.u32 %s150, %s151
      %p153 = scmp.eq.s32.totalorder %s152, 0
      %s155 = sadd.s32 %s154, 1
      %s156 = scalar_select %p153, %s154, %s155
      %p159 = pneg %p153
      %p160 = scmp.eq.s32.totalorder %s18, 1
      %p161 = por %p159, %p160
      %p162 = scmp.ne.s32.totalorder %s154, %s157
      %p163 = scmp.eq.s32.totalorder %s18, 0
      %p164 = por %p162, %p163
      %p165 = scmp.ne.s32.totalorder %s154, %s157
      %p166 = scmp.eq.s32.totalorder %s23, 1
      %p167 = por %p165, %p166
      %p168 = scmp.ne.s32.totalorder %s157, %s158
      %p169 = scmp.eq.s32.totalorder %s23, 0
      %p170 = por %p168, %p169
      %p171 = scmp.ne.s32.totalorder %s157, %s158
      %p172 = scmp.eq.s32.totalorder %s24, 1
      %p173 = por %p171, %p172
      %p175 = scmp.ne.s32.totalorder %s158, %s174
      %p176 = scmp.eq.s32.totalorder %s24, 0
      %p177 = por %p175, %p176
      %p178 = scmp.le.s32.totalorder 1, %s18
      %p179 = scmp.lt.s32.totalorder %s18, 3
      %p180 = pnand %p178, %p179
      %p181 = pneg %p180
      // Predicated region
      $region9: #{tpu_custom_call.1} parent=5 // pred_check
        _
      $region10: #{tpu_custom_call.1} parent=5 // pred_check_branch
        %183 = sbr.rel (%p180) target = $region12
      $region11: #{tpu_custom_call.1} parent=5 // pred_region
        %s184 = ssub.s32 %s18, 1
        // Predicated region
        $region13: #{tpu_custom_call.1} parent=11 // pred_check
          %p185 = pneg %p79
        $region14: #{tpu_custom_call.1} parent=11 // pred_check_branch
          %187 = sbr.rel (%p185) target = $region16
        $region15: #{tpu_custom_call.1} parent=11 // pred_region
          %s189 = ssub.s32 192, 192
          %190 = vsyncadd [#allocation7], %s189
          %s191 = sshll.u32 [#allocation6], 4
          %s192 = int_to_ptr.vmem [resolvable:$true] %s191
          %197 = dma.hbm_to_vmem [thread:$0]  %s1, 192, %s192, [#allocation7], 64, 64, 4
        $region16: #{tpu_custom_call.1} parent=11 // pred_fallthru
          _
        // Predicated region
        $region17: #{tpu_custom_call.1} parent=11 // pred_check
          %p198 = pneg %p100
        $region18: #{tpu_custom_call.1} parent=11 // pred_check_branch
          %200 = sbr.rel (%p198) target = $region20
        $region19: #{tpu_custom_call.1} parent=11 // pred_region
          _
        $region20: #{tpu_custom_call.1} parent=11 // pred_fallthru
          _
        // Predicated region
        $region21: #{tpu_custom_call.1} parent=11 // pred_check
          %p201 = pneg %p121
        $region22: #{tpu_custom_call.1} parent=11 // pred_check_branch
          %203 = sbr.rel (%p201) target = $region24
        $region23: #{tpu_custom_call.1} parent=11 // pred_region
          %s205 = ssub.s32 1024, 1024
          %206 = vsyncadd [#allocation7], %s205
          %s207 = sshll.u32 [#allocation8], 4
          %s208 = int_to_ptr.vmem [resolvable:$true] %s207
          %213 = dma.hbm_to_vmem [thread:$0]  %s3, 1024, %s208, [#allocation7], 64, 64, 4
        $region24: #{tpu_custom_call.1} parent=11 // pred_fallthru
          _
        // Predicated region
        $region25: #{tpu_custom_call.1} parent=11 // pred_check
          %p214 = pneg %p142
        $region26: #{tpu_custom_call.1} parent=11 // pred_check_branch
          %216 = sbr.rel (%p214) target = $region28
        $region27: #{tpu_custom_call.1} parent=11 // pred_region
          _
        $region28: #{tpu_custom_call.1} parent=11 // pred_fallthru
          _
      $region12: #{tpu_custom_call.1} parent=5 // pred_fallthru
        _
      %p217 = scmp.lt.s32.totalorder %s18, 2
      // Predicated region
      $region29: #{tpu_custom_call.1} parent=5 // pred_check
        %p218 = pneg %p217
      $region30: #{tpu_custom_call.1} parent=5 // pred_check_branch
        %220 = sbr.rel (%p218) target = $region32
      $region31: #{tpu_custom_call.1} parent=5 // pred_region
        // Predicated region
        $region33: #{tpu_custom_call.1} parent=31 // pred_check
          %p221 = pneg %p52
        $region34: #{tpu_custom_call.1} parent=31 // pred_check_branch
          %223 = sbr.rel (%p221) target = $region36
        $region35: #{tpu_custom_call.1} parent=31 // pred_region
          %s224 = sand.u32 %s42, 1
          %s225 = scalar_lea.sflag [#allocation4], %s224
          %s226 = sand.u32 %s42, 1
          %s227 = smul.addr %s226, 216
          %s228 = scalar_lea.vmem [#allocation3], %s227
          %s230 = ssub.s32 3456, 3456
          %231 = vsyncadd %s225, %s230
          %s232 = smul.addr %s26, 54
          %s233 = smul.addr %s25, 54
          %s234 = sadd.s32 %s232, %s233
          %s235 = smul.addr %s234, 64
          %s236 = scalar_lea.hbm %s0, %s235
          %s237 = sshll.u32 %s228, 4
          %s238 = int_to_ptr.vmem [resolvable:$true] %s237
          %243 = dma.hbm_to_vmem [thread:$0]  %s236, 3456, %s238, %s225, 64, 64, 4
        $region36: #{tpu_custom_call.1} parent=31 // pred_fallthru
          _
      $region32: #{tpu_custom_call.1} parent=5 // pred_fallthru
        _
      %p244 = scmp.le.s32.totalorder 1, %s18
      %p245 = scmp.lt.s32.totalorder %s18, 3
      %p246 = pnand %p244, %p245
      %p247 = pneg %p246
      // Predicated region
      $region37: #{tpu_custom_call.1} parent=5 // pred_check
        _
      $region38: #{tpu_custom_call.1} parent=5 // pred_check_branch
        %249 = sbr.rel (%p246) target = $region40
      $region39: #{tpu_custom_call.1} parent=5 // pred_region
        %s250 = ssub.s32 %s18, 1
        %s251 = sand.u32 %s45, 1
        %s252 = scalar_lea.sflag [#allocation4], %s251
        %s253 = sand.u32 %s45, 1
        %s254 = smul.addr %s253, 216
        %s255 = scalar_lea.vmem [#allocation3], %s254
        // Predicated region
        $region41: #{tpu_custom_call.1} parent=39 // pred_check
          %p256 = pneg %p58
        $region42: #{tpu_custom_call.1} parent=39 // pred_check_branch
          %258 = sbr.rel (%p256) target = $region44
        $region43: #{tpu_custom_call.1} parent=39 // pred_region
          %259 = dma.done %s252, 3456
        $region44: #{tpu_custom_call.1} parent=39 // pred_fallthru
          _
        // Predicated region
        $region45: #{tpu_custom_call.1} parent=39 // pred_check
          %p260 = pneg %p79
        $region46: #{tpu_custom_call.1} parent=39 // pred_check_branch
          %262 = sbr.rel (%p260) target = $region48
        $region47: #{tpu_custom_call.1} parent=39 // pred_region
          %263 = dma.done [#allocation7], 192
        $region48: #{tpu_custom_call.1} parent=39 // pred_fallthru
          _
        // Predicated region
        $region49: #{tpu_custom_call.1} parent=39 // pred_check
          %p264 = pneg %p121
        $region50: #{tpu_custom_call.1} parent=39 // pred_check_branch
          %266 = sbr.rel (%p264) target = $region52
        $region51: #{tpu_custom_call.1} parent=39 // pred_region
          %267 = dma.done [#allocation7], 1024
        $region52: #{tpu_custom_call.1} parent=39 // pred_fallthru
          _
        %s268 = sand.u32 %s45, 1
        %s269 = scalar_lea.sflag [#allocation4], %s268
        %s270 = sand.u32 %s45, 1
        %s271 = smul.addr %s270, 216
        %s272 = scalar_lea.vmem [#allocation3], %s271
        %p273 = pneg %p58
        %p274 = pneg %p55
        %p275 = pneg %p79
        %p276 = pneg %p76
        %p277 = pneg %p100
        %p278 = pneg %p97
        %p279 = pneg %p121
        %p280 = pneg %p118
        %p281 = pneg %p142
        %p282 = pneg %p139
        %p283 = pneg %p170
        %p284 = pneg %p167
        %s285 = sand.u32 %s157, 1
        %s286 = scalar_lea.sflag [#allocation5], %s285
        %s287 = sand.u32 %s157, 1
        %s288 = smul.addr %s287, 256
        %s289 = scalar_lea.vmem [#allocation9], %s288
        %s290 = smul.u32 16, %s28
        %v292 = vld [vmem:[#allocation6] sm:$0x7]
        %v293 = vld [vmem:[#allocation6 + $0x4] sm:$0x7]
        %v294 = vld [vmem:[#allocation6 + $0x8] sm:$0x7]
        %v295 = vld [vmem:[%s4] sm:$0x1]
        loop: start=0, step=1, limit=2
        $region53: #{tpu_custom_call.1} parent=39 // loop_pre_header
          _
        $region54: #{tpu_custom_call.1} parent=39 // loop_header
          %s297 = sphi 0, %s301
          %p298 = scmp.ge.s32.totalorder %s297, 2
        $region55: #{tpu_custom_call.1} parent=39 // loop_header_branch
          %300 = sbr.rel (%p298) target = $region59
        $region56: #{tpu_custom_call.1} parent=39 // loop_body
          %s302 = smul.u32 %s297, 8
          %s303 = smul.u32 %s302, 3
          %s304 = smul.addr %s303, 4
          %s305 = scalar_lea.vmem %s255, %s304 [#allocation3]
          %v306 = vld [vmem:[%s305] sm:$0xf]
          %v307 = vld [vmem:[%s305 + $0x4] sm:$0xf]
          %v308 = vld [vmem:[%s305 + $0x8] sm:$0xf]
          %v309 = vld [vmem:[%s305 + $0xc] sm:$0xf]
          %v310 = vld [vmem:[%s305 + $0x10] sm:$0xf]
          %v311 = vld [vmem:[%s305 + $0x14] sm:$0xf]
          %v312 = vld [vmem:[%s305 + $0x18] sm:$0xf]
          %v313 = vld [vmem:[%s305 + $0x1c] sm:$0xf]
          %v314 = vld [vmem:[%s305 + $0x20] sm:$0xf]
          %v315 = vld [vmem:[%s305 + $0x24] sm:$0xf]
          %v316 = vld [vmem:[%s305 + $0x28] sm:$0xf]
          %v317 = vld [vmem:[%s305 + $0x2c] sm:$0xf]
          %v318 = vld [vmem:[%s305 + $0x30] sm:$0xf]
          %v319 = vld [vmem:[%s305 + $0x34] sm:$0xf]
          %v320 = vld [vmem:[%s305 + $0x38] sm:$0xf]
          %v321 = vld [vmem:[%s305 + $0x3c] sm:$0xf]
          %v322 = vld [vmem:[%s305 + $0x40] sm:$0xf]
          %v323 = vld [vmem:[%s305 + $0x44] sm:$0xf]
          %v324 = vld [vmem:[%s305 + $0x48] sm:$0xf]
          %v325 = vld [vmem:[%s305 + $0x4c] sm:$0xf]
          %v326 = vld [vmem:[%s305 + $0x50] sm:$0xf]
          %v327 = vld [vmem:[%s305 + $0x54] sm:$0xf]
          %v328 = vld [vmem:[%s305 + $0x58] sm:$0xf]
          %v329 = vld [vmem:[%s305 + $0x5c] sm:$0xf]
          %v330 = vld [vmem:[%s305 + $0x60] sm:$0xf]
          %v331 = vld [vmem:[%s305 + $0x64] sm:$0xf]
          %v332 = vld [vmem:[%s305 + $0x68] sm:$0xf]
          %v333 = vld [vmem:[%s305 + $0x6c] sm:$0xf]
          %v334 = vld [vmem:[%s305 + $0x70] sm:$0xf]
          %v335 = vld [vmem:[%s305 + $0x74] sm:$0xf]
          %v336 = vmax.bf16 %v306, 0
          %v337 = vmax.bf16 %v307, 0
          %v338 = vmax.bf16 %v308, 0
          %v339 = vmax.bf16 %v309, 0
          %v340 = vmax.bf16 %v310, 0
          %v341 = vmax.bf16 %v311, 0
          %v342 = vmax.bf16 %v312, 0
          %v343 = vmax.bf16 %v313, 0
          %v344 = vmax.bf16 %v314, 0
          %v345 = vmax.bf16 %v315, 0
          %v346 = vmax.bf16 %v316, 0
          %v347 = vmax.bf16 %v317, 0
          %v348 = vmax.bf16 %v318, 0
          %v349 = vmax.bf16 %v319, 0
          %v350 = vmax.bf16 %v320, 0
          %v351 = vmax.bf16 %v321, 0
          %v352 = vmax.bf16 %v322, 0
          %v353 = vmax.bf16 %v323, 0
          %v354 = vmax.bf16 %v324, 0
          %v355 = vmax.bf16 %v325, 0
          %v356 = vmax.bf16 %v326, 0
          %v357 = vmax.bf16 %v327, 0
          %v358 = vmax.bf16 %v328, 0
          %v359 = vmax.bf16 %v329, 0
          %v360 = vmax.bf16 %v330, 0
          %v361 = vmax.bf16 %v331, 0
          %v362 = vmax.bf16 %v332, 0
          %v363 = vmax.bf16 %v333, 0
          %v364 = vmax.bf16 %v334, 0
          %v365 = vmax.bf16 %v335, 0
          %v366 = vunpack.c.l.bf16 %v336
          %v367 = vunpack.c.l.bf16 %v337
          %v368 = vunpack.c.l.bf16 %v339
          %v369 = vunpack.c.l.bf16 %v340
          %v370 = vunpack.c.l.bf16 %v342
          %v371 = vunpack.c.l.bf16 %v343
          %v372 = vunpack.c.l.bf16 %v345
          %v373 = vunpack.c.l.bf16 %v346
          %v374 = vunpack.c.l.bf16 %v348
          %v375 = vunpack.c.l.bf16 %v349
          %v376 = vunpack.c.l.bf16 %v351
          %v377 = vunpack.c.l.bf16 %v352
          %v378 = vunpack.c.l.bf16 %v354
          %v379 = vunpack.c.l.bf16 %v355
          %v380 = vunpack.c.l.bf16 %v357
          %v381 = vunpack.c.l.bf16 %v358
          %v382 = vlaneseq
          %v383 = vshrl.u32 %v382, 7
          %v384 = vsub.s32 0, %v383
          %v385 = vrot.slane %v292, %v384
          %v386 = vmul.f32 %v366, %v385
          %v387 = vmul.f32 %v367, %v385
          %v388 = vmul.f32 %v368, %v385
          %v389 = vmul.f32 %v369, %v385
          %v390 = vmul.f32 %v370, %v385
          %v391 = vmul.f32 %v371, %v385
          %v392 = vmul.f32 %v372, %v385
          %v393 = vmul.f32 %v373, %v385
          %v394 = vmul.f32 %v374, %v385
          %v395 = vmul.f32 %v375, %v385
          %v396 = vmul.f32 %v376, %v385
          %v397 = vmul.f32 %v377, %v385
          %v398 = vmul.f32 %v378, %v385
          %v399 = vmul.f32 %v379, %v385
          %v400 = vmul.f32 %v380, %v385
          %v401 = vmul.f32 %v381, %v385
          %v402 = vadd.f32 %v386, 0.0
          %v403 = vadd.f32 %v387, 0.0
          %v404 = vadd.f32 %v388, 0.0
          %v405 = vadd.f32 %v389, 0.0
          %v406 = vadd.f32 %v390, 0.0
          %v407 = vadd.f32 %v391, 0.0
          %v408 = vadd.f32 %v392, 0.0
          %v409 = vadd.f32 %v393, 0.0
          %v410 = vadd.f32 %v394, 0.0
          %v411 = vadd.f32 %v395, 0.0
          %v412 = vadd.f32 %v396, 0.0
          %v413 = vadd.f32 %v397, 0.0
          %v414 = vadd.f32 %v398, 0.0
          %v415 = vadd.f32 %v399, 0.0
          %v416 = vadd.f32 %v400, 0.0
          %v417 = vadd.f32 %v401, 0.0
          %v418 = vunpack.c.l.bf16 %v338
          %v419 = vunpack.c.l.bf16 %v341
          %v420 = vunpack.c.l.bf16 %v344
          %v421 = vunpack.c.l.bf16 %v347
          %v422 = vunpack.c.l.bf16 %v350
          %v423 = vunpack.c.l.bf16 %v353
          %v424 = vunpack.c.l.bf16 %v356
          %v425 = vunpack.c.l.bf16 %v359
          %v426 = vlaneseq
          %v427 = vshrl.u32 %v426, 7
          %v428 = vsub.s32 1, %v427
          %v429 = vrot.slane %v292, %v428
          %v430 = vmul.f32 %v366, %v429
          %v431 = vmul.f32 %v367, %v429
          %v432 = vmul.f32 %v418, %v429
          %v433 = vmul.f32 %v368, %v429
          %v434 = vmul.f32 %v369, %v429
          %v435 = vmul.f32 %v419, %v429
          %v436 = vmul.f32 %v370, %v429
          %v437 = vmul.f32 %v371, %v429
          %v438 = vmul.f32 %v420, %v429
          %v439 = vmul.f32 %v372, %v429
          %v440 = vmul.f32 %v373, %v429
          %v441 = vmul.f32 %v421, %v429
          %v442 = vmul.f32 %v374, %v429
          %v443 = vmul.f32 %v375, %v429
          %v444 = vmul.f32 %v422, %v429
          %v445 = vmul.f32 %v376, %v429
          %v446 = vmul.f32 %v377, %v429
          %v447 = vmul.f32 %v423, %v429
          %v448 = vmul.f32 %v378, %v429
          %v449 = vmul.f32 %v379, %v429
          %v450 = vmul.f32 %v424, %v429
          %v451 = vmul.f32 %v380, %v429
          %v452 = vmul.f32 %v381, %v429
          %v453 = vmul.f32 %v425, %v429
          %vm478 = vcmask 1046528
          %v479 = vrot.slane %v430, 1
          %v480 = vrot.slane %v431, 1
          %v481 = vsel %vm478, %v479, %v480
          %v482 = vrot.slane %v432, 1
          %v483 = vsel %vm478, %v480, %v482
          %v484 = vrot.slane %v433, 1
          %v485 = vrot.slane %v434, 1
          %v486 = vsel %vm478, %v484, %v485
          %v487 = vrot.slane %v435, 1
          %v488 = vsel %vm478, %v485, %v487
          %v489 = vrot.slane %v436, 1
          %v490 = vrot.slane %v437, 1
          %v491 = vsel %vm478, %v489, %v490
          %v492 = vrot.slane %v438, 1
          %v493 = vsel %vm478, %v490, %v492
          %v494 = vrot.slane %v439, 1
          %v495 = vrot.slane %v440, 1
          %v496 = vsel %vm478, %v494, %v495
          %v497 = vrot.slane %v441, 1
          %v498 = vsel %vm478, %v495, %v497
          %v499 = vrot.slane %v442, 1
          %v500 = vrot.slane %v443, 1
          %v501 = vsel %vm478, %v499, %v500
          %v502 = vrot.slane %v444, 1
          %v503 = vsel %vm478, %v500, %v502
          %v504 = vrot.slane %v445, 1
          %v505 = vrot.slane %v446, 1
          %v506 = vsel %vm478, %v504, %v505
          %v507 = vrot.slane %v447, 1
          %v508 = vsel %vm478, %v505, %v507
          %v509 = vrot.slane %v448, 1
          %v510 = vrot.slane %v449, 1
          %v511 = vsel %vm478, %v509, %v510
          %v512 = vrot.slane %v450, 1
          %v513 = vsel %vm478, %v510, %v512
          %v514 = vrot.slane %v451, 1
          %v515 = vrot.slane %v452, 1
          %v516 = vsel %vm478, %v514, %v515
          %v517 = vrot.slane %v453, 1
          %v518 = vsel %vm478, %v515, %v517
          %v535 = vadd.f32 %v402, %v481
          %v536 = vadd.f32 %v403, %v483
          %v537 = vadd.f32 %v404, %v486
          %v538 = vadd.f32 %v405, %v488
          %v539 = vadd.f32 %v406, %v491
          %v540 = vadd.f32 %v407, %v493
          %v541 = vadd.f32 %v408, %v496
          %v542 = vadd.f32 %v409, %v498
          %v543 = vadd.f32 %v410, %v501
          %v544 = vadd.f32 %v411, %v503
          %v545 = vadd.f32 %v412, %v506
          %v546 = vadd.f32 %v413, %v508
          %v547 = vadd.f32 %v414, %v511
          %v548 = vadd.f32 %v415, %v513
          %v549 = vadd.f32 %v416, %v516
          %v550 = vadd.f32 %v417, %v518
          %v551 = vlaneseq
          %v552 = vshrl.u32 %v551, 7
          %v553 = vsub.s32 2, %v552
          %v554 = vrot.slane %v292, %v553
          %v555 = vmul.f32 %v366, %v554
          %v556 = vmul.f32 %v367, %v554
          %v557 = vmul.f32 %v418, %v554
          %v558 = vmul.f32 %v368, %v554
          %v559 = vmul.f32 %v369, %v554
          %v560 = vmul.f32 %v419, %v554
          %v561 = vmul.f32 %v370, %v554
          %v562 = vmul.f32 %v371, %v554
          %v563 = vmul.f32 %v420, %v554
          %v564 = vmul.f32 %v372, %v554
          %v565 = vmul.f32 %v373, %v554
          %v566 = vmul.f32 %v421, %v554
          %v567 = vmul.f32 %v374, %v554
          %v568 = vmul.f32 %v375, %v554
          %v569 = vmul.f32 %v422, %v554
          %v570 = vmul.f32 %v376, %v554
          %v571 = vmul.f32 %v377, %v554
          %v572 = vmul.f32 %v423, %v554
          %v573 = vmul.f32 %v378, %v554
          %v574 = vmul.f32 %v379, %v554
          %v575 = vmul.f32 %v424, %v554
          %v576 = vmul.f32 %v380, %v554
          %v577 = vmul.f32 %v381, %v554
          %v578 = vmul.f32 %v425, %v554
          %vm603 = vcmask 1045504
          %v604 = vrot.slane %v555, 2
          %v605 = vrot.slane %v556, 2
          %v606 = vsel %vm603, %v604, %v605
          %v607 = vrot.slane %v557, 2
          %v608 = vsel %vm603, %v605, %v607
          %v609 = vrot.slane %v558, 2
          %v610 = vrot.slane %v559, 2
          %v611 = vsel %vm603, %v609, %v610
          %v612 = vrot.slane %v560, 2
          %v613 = vsel %vm603, %v610, %v612
          %v614 = vrot.slane %v561, 2
          %v615 = vrot.slane %v562, 2
          %v616 = vsel %vm603, %v614, %v615
          %v617 = vrot.slane %v563, 2
          %v618 = vsel %vm603, %v615, %v617
          %v619 = vrot.slane %v564, 2
          %v620 = vrot.slane %v565, 2
          %v621 = vsel %vm603, %v619, %v620
          %v622 = vrot.slane %v566, 2
          %v623 = vsel %vm603, %v620, %v622
          %v624 = vrot.slane %v567, 2
          %v625 = vrot.slane %v568, 2
          %v626 = vsel %vm603, %v624, %v625
          %v627 = vrot.slane %v569, 2
          %v628 = vsel %vm603, %v625, %v627
          %v629 = vrot.slane %v570, 2
          %v630 = vrot.slane %v571, 2
          %v631 = vsel %vm603, %v629, %v630
          %v632 = vrot.slane %v572, 2
          %v633 = vsel %vm603, %v630, %v632
          %v634 = vrot.slane %v573, 2
          %v635 = vrot.slane %v574, 2
          %v636 = vsel %vm603, %v634, %v635
          %v637 = vrot.slane %v575, 2
          %v638 = vsel %vm603, %v635, %v637
          %v639 = vrot.slane %v576, 2
          %v640 = vrot.slane %v577, 2
          %v641 = vsel %vm603, %v639, %v640
          %v642 = vrot.slane %v578, 2
          %v643 = vsel %vm603, %v640, %v642
          %v660 = vadd.f32 %v535, %v606
          %v661 = vadd.f32 %v536, %v608
          %v662 = vadd.f32 %v537, %v611
          %v663 = vadd.f32 %v538, %v613
          %v664 = vadd.f32 %v539, %v616
          %v665 = vadd.f32 %v540, %v618
          %v666 = vadd.f32 %v541, %v621
          %v667 = vadd.f32 %v542, %v623
          %v668 = vadd.f32 %v543, %v626
          %v669 = vadd.f32 %v544, %v628
          %v670 = vadd.f32 %v545, %v631
          %v671 = vadd.f32 %v546, %v633
          %v672 = vadd.f32 %v547, %v636
          %v673 = vadd.f32 %v548, %v638
          %v674 = vadd.f32 %v549, %v641
          %v675 = vadd.f32 %v550, %v643
          %v676 = vunpack.c.l.bf16 %v360
          %v677 = vunpack.c.l.bf16 %v361
          %v678 = vlaneseq
          %v679 = vshrl.u32 %v678, 7
          %v680 = vsub.s32 0, %v679
          %v681 = vrot.slane %v293, %v680
          %v682 = vmul.f32 %v368, %v681
          %v683 = vmul.f32 %v369, %v681
          %v684 = vmul.f32 %v370, %v681
          %v685 = vmul.f32 %v371, %v681
          %v686 = vmul.f32 %v372, %v681
          %v687 = vmul.f32 %v373, %v681
          %v688 = vmul.f32 %v374, %v681
          %v689 = vmul.f32 %v375, %v681
          %v690 = vmul.f32 %v376, %v681
          %v691 = vmul.f32 %v377, %v681
          %v692 = vmul.f32 %v378, %v681
          %v693 = vmul.f32 %v379, %v681
          %v694 = vmul.f32 %v380, %v681
          %v695 = vmul.f32 %v381, %v681
          %v696 = vmul.f32 %v676, %v681
          %v697 = vmul.f32 %v677, %v681
          %v698 = vadd.f32 %v660, %v682
          %v699 = vadd.f32 %v661, %v683
          %v700 = vadd.f32 %v662, %v684
          %v701 = vadd.f32 %v663, %v685
          %v702 = vadd.f32 %v664, %v686
          %v703 = vadd.f32 %v665, %v687
          %v704 = vadd.f32 %v666, %v688
          %v705 = vadd.f32 %v667, %v689
          %v706 = vadd.f32 %v668, %v690
          %v707 = vadd.f32 %v669, %v691
          %v708 = vadd.f32 %v670, %v692
          %v709 = vadd.f32 %v671, %v693
          %v710 = vadd.f32 %v672, %v694
          %v711 = vadd.f32 %v673, %v695
          %v712 = vadd.f32 %v674, %v696
          %v713 = vadd.f32 %v675, %v697
          %v714 = vunpack.c.l.bf16 %v362
          %v715 = vlaneseq
          %v716 = vshrl.u32 %v715, 7
          %v717 = vsub.s32 1, %v716
          %v718 = vrot.slane %v293, %v717
          %v719 = vmul.f32 %v368, %v718
          %v720 = vmul.f32 %v369, %v718
          %v721 = vmul.f32 %v419, %v718
          %v722 = vmul.f32 %v370, %v718
          %v723 = vmul.f32 %v371, %v718
          %v724 = vmul.f32 %v420, %v718
          %v725 = vmul.f32 %v372, %v718
          %v726 = vmul.f32 %v373, %v718
          %v727 = vmul.f32 %v421, %v718
          %v728 = vmul.f32 %v374, %v718
          %v729 = vmul.f32 %v375, %v718
          %v730 = vmul.f32 %v422, %v718
          %v731 = vmul.f32 %v376, %v718
          %v732 = vmul.f32 %v377, %v718
          %v733 = vmul.f32 %v423, %v718
          %v734 = vmul.f32 %v378, %v718
          %v735 = vmul.f32 %v379, %v718
          %v736 = vmul.f32 %v424, %v718
          %v737 = vmul.f32 %v380, %v718
          %v738 = vmul.f32 %v381, %v718
          %v739 = vmul.f32 %v425, %v718
          %v740 = vmul.f32 %v676, %v718
          %v741 = vmul.f32 %v677, %v718
          %v742 = vmul.f32 %v714, %v718
          %v767 = vrot.slane %v719, 1
          %v768 = vrot.slane %v720, 1
          %v769 = vsel %vm478, %v767, %v768
          %v770 = vrot.slane %v721, 1
          %v771 = vsel %vm478, %v768, %v770
          %v772 = vrot.slane %v722, 1
          %v773 = vrot.slane %v723, 1
          %v774 = vsel %vm478, %v772, %v773
          %v775 = vrot.slane %v724, 1
          %v776 = vsel %vm478, %v773, %v775
          %v777 = vrot.slane %v725, 1
          %v778 = vrot.slane %v726, 1
          %v779 = vsel %vm478, %v777, %v778
          %v780 = vrot.slane %v727, 1
          %v781 = vsel %vm478, %v778, %v780
          %v782 = vrot.slane %v728, 1
          %v783 = vrot.slane %v729, 1
          %v784 = vsel %vm478, %v782, %v783
          %v785 = vrot.slane %v730, 1
          %v786 = vsel %vm478, %v783, %v785
          %v787 = vrot.slane %v731, 1
          %v788 = vrot.slane %v732, 1
          %v789 = vsel %vm478, %v787, %v788
          %v790 = vrot.slane %v733, 1
          %v791 = vsel %vm478, %v788, %v790
          %v792 = vrot.slane %v734, 1
          %v793 = vrot.slane %v735, 1
          %v794 = vsel %vm478, %v792, %v793
          %v795 = vrot.slane %v736, 1
          %v796 = vsel %vm478, %v793, %v795
          %v797 = vrot.slane %v737, 1
          %v798 = vrot.slane %v738, 1
          %v799 = vsel %vm478, %v797, %v798
          %v800 = vrot.slane %v739, 1
          %v801 = vsel %vm478, %v798, %v800
          %v802 = vrot.slane %v740, 1
          %v803 = vrot.slane %v741, 1
          %v804 = vsel %vm478, %v802, %v803
          %v805 = vrot.slane %v742, 1
          %v806 = vsel %vm478, %v803, %v805
          %v823 = vadd.f32 %v698, %v769
          %v824 = vadd.f32 %v699, %v771
          %v825 = vadd.f32 %v700, %v774
          %v826 = vadd.f32 %v701, %v776
          %v827 = vadd.f32 %v702, %v779
          %v828 = vadd.f32 %v703, %v781
          %v829 = vadd.f32 %v704, %v784
          %v830 = vadd.f32 %v705, %v786
          %v831 = vadd.f32 %v706, %v789
          %v832 = vadd.f32 %v707, %v791
          %v833 = vadd.f32 %v708, %v794
          %v834 = vadd.f32 %v709, %v796
          %v835 = vadd.f32 %v710, %v799
          %v836 = vadd.f32 %v711, %v801
          %v837 = vadd.f32 %v712, %v804
          %v838 = vadd.f32 %v713, %v806
          %v839 = vlaneseq
          %v840 = vshrl.u32 %v839, 7
          %v841 = vsub.s32 2, %v840
          %v842 = vrot.slane %v293, %v841
          %v843 = vmul.f32 %v368, %v842
          %v844 = vmul.f32 %v369, %v842
          %v845 = vmul.f32 %v419, %v842
          %v846 = vmul.f32 %v370, %v842
          %v847 = vmul.f32 %v371, %v842
          %v848 = vmul.f32 %v420, %v842
          %v849 = vmul.f32 %v372, %v842
          %v850 = vmul.f32 %v373, %v842
          %v851 = vmul.f32 %v421, %v842
          %v852 = vmul.f32 %v374, %v842
          %v853 = vmul.f32 %v375, %v842
          %v854 = vmul.f32 %v422, %v842
          %v855 = vmul.f32 %v376, %v842
          %v856 = vmul.f32 %v377, %v842
          %v857 = vmul.f32 %v423, %v842
          %v858 = vmul.f32 %v378, %v842
          %v859 = vmul.f32 %v379, %v842
          %v860 = vmul.f32 %v424, %v842
          %v861 = vmul.f32 %v380, %v842
          %v862 = vmul.f32 %v381, %v842
          %v863 = vmul.f32 %v425, %v842
          %v864 = vmul.f32 %v676, %v842
          %v865 = vmul.f32 %v677, %v842
          %v866 = vmul.f32 %v714, %v842
          %v891 = vrot.slane %v843, 2
          %v892 = vrot.slane %v844, 2
          %v893 = vsel %vm603, %v891, %v892
          %v894 = vrot.slane %v845, 2
          %v895 = vsel %vm603, %v892, %v894
          %v896 = vrot.slane %v846, 2
          %v897 = vrot.slane %v847, 2
          %v898 = vsel %vm603, %v896, %v897
          %v899 = vrot.slane %v848, 2
          %v900 = vsel %vm603, %v897, %v899
          %v901 = vrot.slane %v849, 2
          %v902 = vrot.slane %v850, 2
          %v903 = vsel %vm603, %v901, %v902
          %v904 = vrot.slane %v851, 2
          %v905 = vsel %vm603, %v902, %v904
          %v906 = vrot.slane %v852, 2
          %v907 = vrot.slane %v853, 2
          %v908 = vsel %vm603, %v906, %v907
          %v909 = vrot.slane %v854, 2
          %v910 = vsel %vm603, %v907, %v909
          %v911 = vrot.slane %v855, 2
          %v912 = vrot.slane %v856, 2
          %v913 = vsel %vm603, %v911, %v912
          %v914 = vrot.slane %v857, 2
          %v915 = vsel %vm603, %v912, %v914
          %v916 = vrot.slane %v858, 2
          %v917 = vrot.slane %v859, 2
          %v918 = vsel %vm603, %v916, %v917
          %v919 = vrot.slane %v860, 2
          %v920 = vsel %vm603, %v917, %v919
          %v921 = vrot.slane %v861, 2
          %v922 = vrot.slane %v862, 2
          %v923 = vsel %vm603, %v921, %v922
          %v924 = vrot.slane %v863, 2
          %v925 = vsel %vm603, %v922, %v924
          %v926 = vrot.slane %v864, 2
          %v927 = vrot.slane %v865, 2
          %v928 = vsel %vm603, %v926, %v927
          %v929 = vrot.slane %v866, 2
          %v930 = vsel %vm603, %v927, %v929
          %v947 = vadd.f32 %v823, %v893
          %v948 = vadd.f32 %v824, %v895
          %v949 = vadd.f32 %v825, %v898
          %v950 = vadd.f32 %v826, %v900
          %v951 = vadd.f32 %v827, %v903
          %v952 = vadd.f32 %v828, %v905
          %v953 = vadd.f32 %v829, %v908
          %v954 = vadd.f32 %v830, %v910
          %v955 = vadd.f32 %v831, %v913
          %v956 = vadd.f32 %v832, %v915
          %v957 = vadd.f32 %v833, %v918
          %v958 = vadd.f32 %v834, %v920
          %v959 = vadd.f32 %v835, %v923
          %v960 = vadd.f32 %v836, %v925
          %v961 = vadd.f32 %v837, %v928
          %v962 = vadd.f32 %v838, %v930
          %v963 = vunpack.c.l.bf16 %v363
          %v964 = vunpack.c.l.bf16 %v364
          %v965 = vlaneseq
          %v966 = vshrl.u32 %v965, 7
          %v967 = vsub.s32 0, %v966
          %v968 = vrot.slane %v294, %v967
          %v969 = vmul.f32 %v370, %v968
          %v970 = vmul.f32 %v371, %v968
          %v971 = vmul.f32 %v372, %v968
          %v972 = vmul.f32 %v373, %v968
          %v973 = vmul.f32 %v374, %v968
          %v974 = vmul.f32 %v375, %v968
          %v975 = vmul.f32 %v376, %v968
          %v976 = vmul.f32 %v377, %v968
          %v977 = vmul.f32 %v378, %v968
          %v978 = vmul.f32 %v379, %v968
          %v979 = vmul.f32 %v380, %v968
          %v980 = vmul.f32 %v381, %v968
          %v981 = vmul.f32 %v676, %v968
          %v982 = vmul.f32 %v677, %v968
          %v983 = vmul.f32 %v963, %v968
          %v984 = vmul.f32 %v964, %v968
          %v985 = vadd.f32 %v947, %v969
          %v986 = vadd.f32 %v948, %v970
          %v987 = vadd.f32 %v949, %v971
          %v988 = vadd.f32 %v950, %v972
          %v989 = vadd.f32 %v951, %v973
          %v990 = vadd.f32 %v952, %v974
          %v991 = vadd.f32 %v953, %v975
          %v992 = vadd.f32 %v954, %v976
          %v993 = vadd.f32 %v955, %v977
          %v994 = vadd.f32 %v956, %v978
          %v995 = vadd.f32 %v957, %v979
          %v996 = vadd.f32 %v958, %v980
          %v997 = vadd.f32 %v959, %v981
          %v998 = vadd.f32 %v960, %v982
          %v999 = vadd.f32 %v961, %v983
          %v1000 = vadd.f32 %v962, %v984
          %v1001 = vunpack.c.l.bf16 %v365
          %v1002 = vlaneseq
          %v1003 = vshrl.u32 %v1002, 7
          %v1004 = vsub.s32 1, %v1003
          %v1005 = vrot.slane %v294, %v1004
          %v1006 = vmul.f32 %v370, %v1005
          %v1007 = vmul.f32 %v371, %v1005
          %v1008 = vmul.f32 %v420, %v1005
          %v1009 = vmul.f32 %v372, %v1005
          %v1010 = vmul.f32 %v373, %v1005
          %v1011 = vmul.f32 %v421, %v1005
          %v1012 = vmul.f32 %v374, %v1005
          %v1013 = vmul.f32 %v375, %v1005
          %v1014 = vmul.f32 %v422, %v1005
          %v1015 = vmul.f32 %v376, %v1005
          %v1016 = vmul.f32 %v377, %v1005
          %v1017 = vmul.f32 %v423, %v1005
          %v1018 = vmul.f32 %v378, %v1005
          %v1019 = vmul.f32 %v379, %v1005
          %v1020 = vmul.f32 %v424, %v1005
          %v1021 = vmul.f32 %v380, %v1005
          %v1022 = vmul.f32 %v381, %v1005
          %v1023 = vmul.f32 %v425, %v1005
          %v1024 = vmul.f32 %v676, %v1005
          %v1025 = vmul.f32 %v677, %v1005
          %v1026 = vmul.f32 %v714, %v1005
          %v1027 = vmul.f32 %v963, %v1005
          %v1028 = vmul.f32 %v964, %v1005
          %v1029 = vmul.f32 %v1001, %v1005
          %v1054 = vrot.slane %v1006, 1
          %v1055 = vrot.slane %v1007, 1
          %v1056 = vsel %vm478, %v1054, %v1055
          %v1057 = vrot.slane %v1008, 1
          %v1058 = vsel %vm478, %v1055, %v1057
          %v1059 = vrot.slane %v1009, 1
          %v1060 = vrot.slane %v1010, 1
          %v1061 = vsel %vm478, %v1059, %v1060
          %v1062 = vrot.slane %v1011, 1
          %v1063 = vsel %vm478, %v1060, %v1062
          %v1064 = vrot.slane %v1012, 1
          %v1065 = vrot.slane %v1013, 1
          %v1066 = vsel %vm478, %v1064, %v1065
          %v1067 = vrot.slane %v1014, 1
          %v1068 = vsel %vm478, %v1065, %v1067
          %v1069 = vrot.slane %v1015, 1
          %v1070 = vrot.slane %v1016, 1
          %v1071 = vsel %vm478, %v1069, %v1070
          %v1072 = vrot.slane %v1017, 1
          %v1073 = vsel %vm478, %v1070, %v1072
          %v1074 = vrot.slane %v1018, 1
          %v1075 = vrot.slane %v1019, 1
          %v1076 = vsel %vm478, %v1074, %v1075
          %v1077 = vrot.slane %v1020, 1
          %v1078 = vsel %vm478, %v1075, %v1077
          %v1079 = vrot.slane %v1021, 1
          %v1080 = vrot.slane %v1022, 1
          %v1081 = vsel %vm478, %v1079, %v1080
          %v1082 = vrot.slane %v1023, 1
          %v1083 = vsel %vm478, %v1080, %v1082
          %v1084 = vrot.slane %v1024, 1
          %v1085 = vrot.slane %v1025, 1
          %v1086 = vsel %vm478, %v1084, %v1085
          %v1087 = vrot.slane %v1026, 1
          %v1088 = vsel %vm478, %v1085, %v1087
          %v1089 = vrot.slane %v1027, 1
          %v1090 = vrot.slane %v1028, 1
          %v1091 = vsel %vm478, %v1089, %v1090
          %v1092 = vrot.slane %v1029, 1
          %v1093 = vsel %vm478, %v1090, %v1092
          %v1110 = vadd.f32 %v985, %v1056
          %v1111 = vadd.f32 %v986, %v1058
          %v1112 = vadd.f32 %v987, %v1061
          %v1113 = vadd.f32 %v988, %v1063
          %v1114 = vadd.f32 %v989, %v1066
          %v1115 = vadd.f32 %v990, %v1068
          %v1116 = vadd.f32 %v991, %v1071
          %v1117 = vadd.f32 %v992, %v1073
          %v1118 = vadd.f32 %v993, %v1076
          %v1119 = vadd.f32 %v994, %v1078
          %v1120 = vadd.f32 %v995, %v1081
          %v1121 = vadd.f32 %v996, %v1083
          %v1122 = vadd.f32 %v997, %v1086
          %v1123 = vadd.f32 %v998, %v1088
          %v1124 = vadd.f32 %v999, %v1091
          %v1125 = vadd.f32 %v1000, %v1093
          %v1126 = vlaneseq
          %v1127 = vshrl.u32 %v1126, 7
          %v1128 = vsub.s32 2, %v1127
          %v1129 = vrot.slane %v294, %v1128
          %v1130 = vmul.f32 %v370, %v1129
          %v1131 = vmul.f32 %v371, %v1129
          %v1132 = vmul.f32 %v420, %v1129
          %v1133 = vmul.f32 %v372, %v1129
          %v1134 = vmul.f32 %v373, %v1129
          %v1135 = vmul.f32 %v421, %v1129
          %v1136 = vmul.f32 %v374, %v1129
          %v1137 = vmul.f32 %v375, %v1129
          %v1138 = vmul.f32 %v422, %v1129
          %v1139 = vmul.f32 %v376, %v1129
          %v1140 = vmul.f32 %v377, %v1129
          %v1141 = vmul.f32 %v423, %v1129
          %v1142 = vmul.f32 %v378, %v1129
          %v1143 = vmul.f32 %v379, %v1129
          %v1144 = vmul.f32 %v424, %v1129
          %v1145 = vmul.f32 %v380, %v1129
          %v1146 = vmul.f32 %v381, %v1129
          %v1147 = vmul.f32 %v425, %v1129
          %v1148 = vmul.f32 %v676, %v1129
          %v1149 = vmul.f32 %v677, %v1129
          %v1150 = vmul.f32 %v714, %v1129
          %v1151 = vmul.f32 %v963, %v1129
          %v1152 = vmul.f32 %v964, %v1129
          %v1153 = vmul.f32 %v1001, %v1129
          %v1178 = vrot.slane %v1130, 2
          %v1179 = vrot.slane %v1131, 2
          %v1180 = vsel %vm603, %v1178, %v1179
          %v1181 = vrot.slane %v1132, 2
          %v1182 = vsel %vm603, %v1179, %v1181
          %v1183 = vrot.slane %v1133, 2
          %v1184 = vrot.slane %v1134, 2
          %v1185 = vsel %vm603, %v1183, %v1184
          %v1186 = vrot.slane %v1135, 2
          %v1187 = vsel %vm603, %v1184, %v1186
          %v1188 = vrot.slane %v1136, 2
          %v1189 = vrot.slane %v1137, 2
          %v1190 = vsel %vm603, %v1188, %v1189
          %v1191 = vrot.slane %v1138, 2
          %v1192 = vsel %vm603, %v1189, %v1191
          %v1193 = vrot.slane %v1139, 2
          %v1194 = vrot.slane %v1140, 2
          %v1195 = vsel %vm603, %v1193, %v1194
          %v1196 = vrot.slane %v1141, 2
          %v1197 = vsel %vm603, %v1194, %v1196
          %v1198 = vrot.slane %v1142, 2
          %v1199 = vrot.slane %v1143, 2
          %v1200 = vsel %vm603, %v1198, %v1199
          %v1201 = vrot.slane %v1144, 2
          %v1202 = vsel %vm603, %v1199, %v1201
          %v1203 = vrot.slane %v1145, 2
          %v1204 = vrot.slane %v1146, 2
          %v1205 = vsel %vm603, %v1203, %v1204
          %v1206 = vrot.slane %v1147, 2
          %v1207 = vsel %vm603, %v1204, %v1206
          %v1208 = vrot.slane %v1148, 2
          %v1209 = vrot.slane %v1149, 2
          %v1210 = vsel %vm603, %v1208, %v1209
          %v1211 = vrot.slane %v1150, 2
          %v1212 = vsel %vm603, %v1209, %v1211
          %v1213 = vrot.slane %v1151, 2
          %v1214 = vrot.slane %v1152, 2
          %v1215 = vsel %vm603, %v1213, %v1214
          %v1216 = vrot.slane %v1153, 2
          %v1217 = vsel %vm603, %v1214, %v1216
          %v1234 = vadd.f32 %v1110, %v1180
          %v1235 = vadd.f32 %v1111, %v1182
          %v1236 = vadd.f32 %v1112, %v1185
          %v1237 = vadd.f32 %v1113, %v1187
          %v1238 = vadd.f32 %v1114, %v1190
          %v1239 = vadd.f32 %v1115, %v1192
          %v1240 = vadd.f32 %v1116, %v1195
          %v1241 = vadd.f32 %v1117, %v1197
          %v1242 = vadd.f32 %v1118, %v1200
          %v1243 = vadd.f32 %v1119, %v1202
          %v1244 = vadd.f32 %v1120, %v1205
          %v1245 = vadd.f32 %v1121, %v1207
          %v1246 = vadd.f32 %v1122, %v1210
          %v1247 = vadd.f32 %v1123, %v1212
          %v1248 = vadd.f32 %v1124, %v1215
          %v1249 = vadd.f32 %v1125, %v1217
          %v1250 = vpack.c.bf16 %v1235, %v1234
          %v1251 = vpack.c.bf16 %v1237, %v1236
          %v1252 = vpack.c.bf16 %v1239, %v1238
          %v1253 = vpack.c.bf16 %v1241, %v1240
          %v1254 = vpack.c.bf16 %v1243, %v1242
          %v1255 = vpack.c.bf16 %v1245, %v1244
          %v1256 = vpack.c.bf16 %v1247, %v1246
          %v1257 = vpack.c.bf16 %v1249, %v1248
          %s1258 = smul.addr %s302, 8
          %s1259 = scalar_lea.vmem [#allocation2], %s1258
          %1260 = vst [vmem:[%s1259] sm:$0xff] %v1250
          %1261 = vst [vmem:[%s1259 + $0x8] sm:$0xff] %v1251
          %1262 = vst [vmem:[%s1259 + $0x10] sm:$0xff] %v1252
          %1263 = vst [vmem:[%s1259 + $0x18] sm:$0xff] %v1253
          %1264 = vst [vmem:[%s1259 + $0x20] sm:$0xff] %v1254
          %1265 = vst [vmem:[%s1259 + $0x28] sm:$0xff] %v1255
          %1266 = vst [vmem:[%s1259 + $0x30] sm:$0xff] %v1256
          %1267 = vst [vmem:[%s1259 + $0x38] sm:$0xff] %v1257
        $region57: #{tpu_custom_call.1} parent=39 // loop_footer
          %s301 = sadd.s32 1, %s297
        $region58: #{tpu_custom_call.1} parent=39 // loop_footer_branch
          %296 = sbr.rel target = $region54
        $region59: #{tpu_custom_call.1} parent=39 // loop_exit
          _
        %v1268 = vld [vmem:[#allocation2] sm:$0xff]
        %v1269 = vld [vmem:[#allocation2 + $0x8] sm:$0xff]
        %v1270 = vld [vmem:[#allocation2 + $0x10] sm:$0xff]
        %v1271 = vld [vmem:[#allocation2 + $0x18] sm:$0xff]
        %v1272 = vld [vmem:[#allocation2 + $0x20] sm:$0xff]
        %v1273 = vld [vmem:[#allocation2 + $0x28] sm:$0xff]
        %v1274 = vld [vmem:[#allocation2 + $0x30] sm:$0xff]
        %v1275 = vld [vmem:[#allocation2 + $0x38] sm:$0xff]
        %v1276 = vld [vmem:[#allocation2 + $0x40] sm:$0xff]
        %v1277 = vld [vmem:[#allocation2 + $0x48] sm:$0xff]
        %v1278 = vld [vmem:[#allocation2 + $0x50] sm:$0xff]
        %v1279 = vld [vmem:[#allocation2 + $0x58] sm:$0xff]
        %v1280 = vld [vmem:[#allocation2 + $0x60] sm:$0xff]
        %v1281 = vld [vmem:[#allocation2 + $0x68] sm:$0xff]
        %v1282 = vld [vmem:[#allocation2 + $0x70] sm:$0xff]
        %v1283 = vld [vmem:[#allocation2 + $0x78] sm:$0xff]
        %v1284 = vld [vmem:[#allocation8] sm:$0xf]
        %v1285 = vld [vmem:[#allocation8 + $0x4] sm:$0xf]
        %v1286 = vld [vmem:[#allocation8 + $0x8] sm:$0xf]
        %v1287 = vld [vmem:[#allocation8 + $0xc] sm:$0xf]
        %v1288 = vld [vmem:[#allocation8 + $0x10] sm:$0xf]
        %v1289 = vld [vmem:[#allocation8 + $0x14] sm:$0xf]
        %v1290 = vld [vmem:[#allocation8 + $0x18] sm:$0xf]
        %v1291 = vld [vmem:[#allocation8 + $0x1c] sm:$0xf]
        %v1292 = vld [vmem:[#allocation8 + $0x20] sm:$0xf]
        %v1293 = vld [vmem:[#allocation8 + $0x24] sm:$0xf]
        %v1294 = vld [vmem:[#allocation8 + $0x28] sm:$0xf]
        %v1295 = vld [vmem:[#allocation8 + $0x2c] sm:$0xf]
        %v1296 = vld [vmem:[#allocation8 + $0x30] sm:$0xf]
        %v1297 = vld [vmem:[#allocation8 + $0x34] sm:$0xf]
        %v1298 = vld [vmem:[#allocation8 + $0x38] sm:$0xf]
        %v1299 = vld [vmem:[#allocation8 + $0x3c] sm:$0xf]
        %v1301 = vlaneseq
        %v1302 = vshrl.u32 %v1301, 7
        %v1303 = vsub.s32 0, %v1302
        %v1304 = vrot.slane %v295, %v1303
        %v1322 = vunpack.c.l.b16 %v1284
        %v1323 = vunpack.c.l.b16 %v1285
        %v1324 = vunpack.c.l.b16 %v1286
        %v1325 = vunpack.c.l.b16 %v1287
        %v1326 = vunpack.c.l.b16 %v1288
        %v1327 = vunpack.c.l.b16 %v1289
        %v1328 = vunpack.c.l.b16 %v1290
        %v1329 = vunpack.c.l.b16 %v1291
        %v1330 = vunpack.c.l.b16 %v1292
        %v1331 = vunpack.c.l.b16 %v1293
        %v1332 = vunpack.c.l.b16 %v1294
        %v1333 = vunpack.c.l.b16 %v1295
        %v1334 = vunpack.c.l.b16 %v1296
        %v1335 = vunpack.c.l.b16 %v1297
        %v1336 = vunpack.c.l.b16 %v1298
        %v1337 = vunpack.c.l.b16 %v1299
        %v1338 = vpack.c.b16 %v1323, %v1322
        %v1339 = vpack.c.b16 %v1325, %v1324
        %v1340 = vpack.c.b16 %v1327, %v1326
        %v1341 = vpack.c.b16 %v1329, %v1328
        %v1342 = vpack.c.b16 %v1331, %v1330
        %v1343 = vpack.c.b16 %v1333, %v1332
        %v1344 = vpack.c.b16 %v1335, %v1334
        %v1345 = vpack.c.b16 %v1337, %v1336
        %1354 = vmatprep.subr.bf16.mxu0 0
        %1355 = vmatpush1.bf16.msra.mxu0 %v1338
        %1356 = vmatprep.subr.bf16.mxu0 0
        %1357 = vmatpush1.bf16.msra.mxu0 %v1339
        %1358 = vmatprep.subr.bf16.mxu0 0
        %1359 = vmatpush1.bf16.msra.mxu0 %v1340
        %1360 = vmatprep.subr.bf16.mxu0 0
        %1361 = vmatpush1.bf16.msra.mxu0 %v1341
        %1362 = vmatprep.subr.bf16.mxu0 0
        %1363 = vmatpush1.bf16.msra.mxu0 %v1342
        %1364 = vmatprep.subr.bf16.mxu0 0
        %1365 = vmatpush1.bf16.msra.mxu0 %v1343
        %1366 = vmatprep.subr.bf16.mxu0 0
        %1367 = vmatpush1.bf16.msra.mxu0 %v1344
        %1368 = vmatprep.subr.bf16.mxu0 0
        %1369 = vmatpush1.bf16.msra.mxu0 %v1345
        %1370 = vmatprep.subr.bf16.mxu0 0
        %1371 = vmatpush1.bf16.msra.mxu0 0
        %1372 = vmatprep.subr.bf16.mxu0 0
        %1373 = vmatpush1.bf16.msra.mxu0 0
        %1374 = vmatprep.subr.bf16.mxu0 0
        %1375 = vmatpush1.bf16.msra.mxu0 0
        %1376 = vmatprep.subr.bf16.mxu0 0
        %1377 = vmatpush1.bf16.msra.mxu0 0
        %1378 = vmatprep.subr.bf16.mxu0 0
        %1379 = vmatpush1.bf16.msra.mxu0 0
        %1380 = vmatprep.subr.bf16.mxu0 0
        %1381 = vmatpush1.bf16.msra.mxu0 0
        %1382 = vmatprep.subr.bf16.mxu0 0
        %1383 = vmatpush1.bf16.msra.mxu0 0
        %1384 = vmatprep.subr.bf16.mxu0 0
        %1385 = vmatpush1.bf16.msra.mxu0 0
        %1386 = vmatprep.mubr.bf16.mxu0 0
        %1387 = vmatmul.mubr.bf16.gmra.mrb[0].mxu0 %v1268
        %v1388 = vpop.f32.mrb[0].mxu0
        %v1389 = vadd.f32 %v1304, %v1388
        %v1390 = vpop.f32.mrb[0].mxu0
        %v1391 = vpop.f32.mrb[0].mxu0
        %v1392 = vadd.f32 %v1304, %v1391
        %v1393 = vpop.f32.mrb[0].mxu0
        %1394 = vmatprep.mubr.bf16.mxu0 0
        %1395 = vmatmul.mubr.bf16.gmra.mrb[0].mxu0 %v1269
        %v1396 = vpop.f32.mrb[0].mxu0
        %v1397 = vadd.f32 %v1304, %v1396
        %v1398 = vpop.f32.mrb[0].mxu0
        %v1399 = vpop.f32.mrb[0].mxu0
        %v1400 = vadd.f32 %v1304, %v1399
        %v1401 = vpop.f32.mrb[0].mxu0
        %1402 = vmatprep.mubr.bf16.mxu0 0
        %1403 = vmatmul.mubr.bf16.gmra.mrb[0].mxu0 %v1270
        %v1404 = vpop.f32.mrb[0].mxu0
        %v1405 = vadd.f32 %v1304, %v1404
        %v1406 = vpop.f32.mrb[0].mxu0
        %v1407 = vpop.f32.mrb[0].mxu0
        %v1408 = vadd.f32 %v1304, %v1407
        %v1409 = vpop.f32.mrb[0].mxu0
        %1410 = vmatprep.mubr.bf16.mxu0 0
        %1411 = vmatmul.mubr.bf16.gmra.mrb[0].mxu0 %v1271
        %v1412 = vpop.f32.mrb[0].mxu0
        %v1413 = vadd.f32 %v1304, %v1412
        %v1414 = vpop.f32.mrb[0].mxu0
        %v1415 = vpop.f32.mrb[0].mxu0
        %v1416 = vadd.f32 %v1304, %v1415
        %v1417 = vpop.f32.mrb[0].mxu0
        %1418 = vmatprep.mubr.bf16.mxu0 0
        %1419 = vmatmul.mubr.bf16.gmra.mrb[0].mxu0 %v1272
        %v1420 = vpop.f32.mrb[0].mxu0
        %v1421 = vadd.f32 %v1304, %v1420
        %v1422 = vpop.f32.mrb[0].mxu0
        %v1423 = vpop.f32.mrb[0].mxu0
        %v1424 = vadd.f32 %v1304, %v1423
        %v1425 = vpop.f32.mrb[0].mxu0
        %1426 = vmatprep.mubr.bf16.mxu0 0
        %1427 = vmatmul.mubr.bf16.gmra.mrb[0].mxu0 %v1273
        %v1428 = vpop.f32.mrb[0].mxu0
        %v1429 = vadd.f32 %v1304, %v1428
        %v1430 = vpop.f32.mrb[0].mxu0
        %v1431 = vpop.f32.mrb[0].mxu0
        %v1432 = vadd.f32 %v1304, %v1431
        %v1433 = vpop.f32.mrb[0].mxu0
        %1434 = vmatprep.mubr.bf16.mxu0 0
        %1435 = vmatmul.mubr.bf16.gmra.mrb[0].mxu0 %v1274
        %v1436 = vpop.f32.mrb[0].mxu0
        %v1437 = vadd.f32 %v1304, %v1436
        %v1438 = vpop.f32.mrb[0].mxu0
        %v1439 = vpop.f32.mrb[0].mxu0
        %v1440 = vadd.f32 %v1304, %v1439
        %v1441 = vpop.f32.mrb[0].mxu0
        %1442 = vmatprep.mubr.bf16.mxu0 0
        %1443 = vmatmul.mubr.bf16.gmra.mrb[0].mxu0 %v1275
        %v1444 = vpop.f32.mrb[0].mxu0
        %v1445 = vadd.f32 %v1304, %v1444
        %v1446 = vpop.f32.mrb[0].mxu0
        %v1447 = vpop.f32.mrb[0].mxu0
        %v1448 = vadd.f32 %v1304, %v1447
        %v1449 = vpop.f32.mrb[0].mxu0
        %1450 = vmatprep.mubr.bf16.mxu0 0
        %1451 = vmatmul.mubr.bf16.gmra.mrb[0].mxu0 %v1276
        %v1452 = vpop.f32.mrb[0].mxu0
        %v1453 = vadd.f32 %v1304, %v1452
        %v1454 = vpop.f32.mrb[0].mxu0
        %v1455 = vpop.f32.mrb[0].mxu0
        %v1456 = vadd.f32 %v1304, %v1455
        %v1457 = vpop.f32.mrb[0].mxu0
        %1458 = vmatprep.mubr.bf16.mxu0 0
        %1459 = vmatmul.mubr.bf16.gmra.mrb[0].mxu0 %v1277
        %v1460 = vpop.f32.mrb[0].mxu0
        %v1461 = vadd.f32 %v1304, %v1460
        %v1462 = vpop.f32.mrb[0].mxu0
        %v1463 = vpop.f32.mrb[0].mxu0
        %v1464 = vadd.f32 %v1304, %v1463
        %v1465 = vpop.f32.mrb[0].mxu0
        %1466 = vmatprep.mubr.bf16.mxu0 0
        %1467 = vmatmul.mubr.bf16.gmra.mrb[0].mxu0 %v1278
        %v1468 = vpop.f32.mrb[0].mxu0
        %v1469 = vadd.f32 %v1304, %v1468
        %v1470 = vpop.f32.mrb[0].mxu0
        %v1471 = vpop.f32.mrb[0].mxu0
        %v1472 = vadd.f32 %v1304, %v1471
        %v1473 = vpop.f32.mrb[0].mxu0
        %1474 = vmatprep.mubr.bf16.mxu0 0
        %1475 = vmatmul.mubr.bf16.gmra.mrb[0].mxu0 %v1279
        %v1476 = vpop.f32.mrb[0].mxu0
        %v1477 = vadd.f32 %v1304, %v1476
        %v1478 = vpop.f32.mrb[0].mxu0
        %v1479 = vpop.f32.mrb[0].mxu0
        %v1480 = vadd.f32 %v1304, %v1479
        %v1481 = vpop.f32.mrb[0].mxu0
        %1482 = vmatprep.mubr.bf16.mxu0 0
        %1483 = vmatmul.mubr.bf16.gmra.mrb[0].mxu0 %v1280
        %v1484 = vpop.f32.mrb[0].mxu0
        %v1485 = vadd.f32 %v1304, %v1484
        %v1486 = vpop.f32.mrb[0].mxu0
        %v1487 = vpop.f32.mrb[0].mxu0
        %v1488 = vadd.f32 %v1304, %v1487
        %v1489 = vpop.f32.mrb[0].mxu0
        %1490 = vmatprep.mubr.bf16.mxu0 0
        %1491 = vmatmul.mubr.bf16.gmra.mrb[0].mxu0 %v1281
        %v1492 = vpop.f32.mrb[0].mxu0
        %v1493 = vadd.f32 %v1304, %v1492
        %v1494 = vpop.f32.mrb[0].mxu0
        %v1495 = vpop.f32.mrb[0].mxu0
        %v1496 = vadd.f32 %v1304, %v1495
        %v1497 = vpop.f32.mrb[0].mxu0
        %1498 = vmatprep.mubr.bf16.mxu0 0
        %1499 = vmatmul.mubr.bf16.gmra.mrb[0].mxu0 %v1282
        %v1500 = vpop.f32.mrb[0].mxu0
        %v1501 = vadd.f32 %v1304, %v1500
        %v1502 = vpop.f32.mrb[0].mxu0
        %v1503 = vpop.f32.mrb[0].mxu0
        %v1504 = vadd.f32 %v1304, %v1503
        %v1505 = vpop.f32.mrb[0].mxu0
        %1506 = vmatprep.mubr.bf16.mxu0 0
        %1507 = vmatmul.mubr.bf16.gmra.mrb[0].mxu0 %v1283
        %v1508 = vpop.f32.mrb[0].mxu0
        %v1509 = vadd.f32 %v1304, %v1508
        %v1510 = vpop.f32.mrb[0].mxu0
        %v1511 = vpop.f32.mrb[0].mxu0
        %v1512 = vadd.f32 %v1304, %v1511
        %v1513 = vpop.f32.mrb[0].mxu0
        %1514 = vdwg.mxu0
        %1515 = vst [vmem:[%s289] sm:$0xff] %v1389
        %1516 = vst [vmem:[%s289 + $0x8] sm:$0xff] %v1392
        %1517 = vst [vmem:[%s289 + $0x10] sm:$0xff] %v1397
        %1518 = vst [vmem:[%s289 + $0x18] sm:$0xff] %v1400
        %1519 = vst [vmem:[%s289 + $0x20] sm:$0xff] %v1405
        %1520 = vst [vmem:[%s289 + $0x28] sm:$0xff] %v1408
        %1521 = vst [vmem:[%s289 + $0x30] sm:$0xff] %v1413
        %1522 = vst [vmem:[%s289 + $0x38] sm:$0xff] %v1416
        %1523 = vst [vmem:[%s289 + $0x40] sm:$0xff] %v1421
        %1524 = vst [vmem:[%s289 + $0x48] sm:$0xff] %v1424
        %1525 = vst [vmem:[%s289 + $0x50] sm:$0xff] %v1429
        %1526 = vst [vmem:[%s289 + $0x58] sm:$0xff] %v1432
        %1527 = vst [vmem:[%s289 + $0x60] sm:$0xff] %v1437
        %1528 = vst [vmem:[%s289 + $0x68] sm:$0xff] %v1440
        %1529 = vst [vmem:[%s289 + $0x70] sm:$0xff] %v1445
        %1530 = vst [vmem:[%s289 + $0x78] sm:$0xff] %v1448
        %1531 = vst [vmem:[%s289 + $0x80] sm:$0xff] %v1453
        %1532 = vst [vmem:[%s289 + $0x88] sm:$0xff] %v1456
        %1533 = vst [vmem:[%s289 + $0x90] sm:$0xff] %v1461
        %1534 = vst [vmem:[%s289 + $0x98] sm:$0xff] %v1464
        %1535 = vst [vmem:[%s289 + $0xa0] sm:$0xff] %v1469
        %1536 = vst [vmem:[%s289 + $0xa8] sm:$0xff] %v1472
        %1537 = vst [vmem:[%s289 + $0xb0] sm:$0xff] %v1477
        %1538 = vst [vmem:[%s289 + $0xb8] sm:$0xff] %v1480
        %1539 = vst [vmem:[%s289 + $0xc0] sm:$0xff] %v1485
        %1540 = vst [vmem:[%s289 + $0xc8] sm:$0xff] %v1488
        %1541 = vst [vmem:[%s289 + $0xd0] sm:$0xff] %v1493
        %1542 = vst [vmem:[%s289 + $0xd8] sm:$0xff] %v1496
        %1543 = vst [vmem:[%s289 + $0xe0] sm:$0xff] %v1501
        %1544 = vst [vmem:[%s289 + $0xe8] sm:$0xff] %v1504
        %1545 = vst [vmem:[%s289 + $0xf0] sm:$0xff] %v1509
        %1546 = vst [vmem:[%s289 + $0xf8] sm:$0xff] %v1512
        %s1547 = sand.u32 %s157, 1
        %s1548 = scalar_lea.sflag [#allocation5], %s1547
        %s1549 = sand.u32 %s157, 1
        %s1550 = smul.addr %s1549, 256
        %s1551 = scalar_lea.vmem [#allocation9], %s1550
        // Predicated region
        $region60: #{tpu_custom_call.1} parent=39 // pred_check
          %p1552 = pneg %p167
        $region61: #{tpu_custom_call.1} parent=39 // pred_check_branch
          %1554 = sbr.rel (%p1552) target = $region63
        $region62: #{tpu_custom_call.1} parent=39 // pred_region
          %s1555 = smul.u32 16, %s28
          %s1557 = ssub.s32 4096, 4096
          %1558 = vsyncadd %s1548, %s1557
          %s1559 = smul.addr %s1555, 2
          %s1560 = smul.addr %s27, 32
          %s1561 = sadd.s32 %s1559, %s1560
          %s1562 = smul.addr %s1561, 128
          %s1563 = scalar_lea.hbm %s5, %s1562
          %s1564 = sshll.u32 %s1551, 4
          %s1565 = int_to_ptr.vmem [resolvable:$true] %s1564
          %1570 = dma.vmem_to_hbm [thread:$0]  %s1565, 4096, %s1563, %s1548, 128, 128, 8
        $region63: #{tpu_custom_call.1} parent=39 // pred_fallthru
          _
      $region40: #{tpu_custom_call.1} parent=5 // pred_fallthru
        _
      %p1571 = scmp.le.s32.totalorder 2, %s18
      // Predicated region
      $region64: #{tpu_custom_call.1} parent=5 // pred_check
        %p1572 = pneg %p1571
      $region65: #{tpu_custom_call.1} parent=5 // pred_check_branch
        %1574 = sbr.rel (%p1572) target = $region67
      $region66: #{tpu_custom_call.1} parent=5 // pred_region
        %s1575 = ssub.s32 %s18, 2
        // Predicated region
        $region68: #{tpu_custom_call.1} parent=66 // pred_check
          %p1576 = pneg %p173
        $region69: #{tpu_custom_call.1} parent=66 // pred_check_branch
          %1578 = sbr.rel (%p1576) target = $region71
        $region70: #{tpu_custom_call.1} parent=66 // pred_region
          %s1579 = sand.u32 %s158, 1
          %s1580 = scalar_lea.sflag [#allocation5], %s1579
          %s1581 = sand.u32 %s158, 1
          %s1582 = smul.addr %s1581, 256
          %s1583 = scalar_lea.vmem [#allocation9], %s1582
          %1584 = dma.done %s1580, 4096
        $region71: #{tpu_custom_call.1} parent=66 // pred_fallthru
          _
      $region67: #{tpu_custom_call.1} parent=5 // pred_fallthru
        _
    $region6: #{tpu_custom_call.1} parent=1 // loop_footer
      %s22 = sadd.s32 1, %s18
    $region7: #{tpu_custom_call.1} parent=1 // loop_footer_branch
      %17 = sbr.rel target = $region3
    $region8: #{tpu_custom_call.1} parent=1 // loop_exit
      _
    %1585 = vsyncpa [#allocation4], 1
    %s1586 = scalar_lea.sflag [#allocation4], 1
    %1587 = vsyncpa %s1586, 1
    %1588 = vsyncpa [#allocation7], 1
    %1589 = vsyncpa [#allocation5], 1
    %s1590 = scalar_lea.sflag [#allocation5], 1
    %1591 = vsyncpa %s1590, 1

</llo_original>
